<compile_context>
chip_gen: v6e
topology: v6e:2x2x1
jax: 0.10.0
libtpu: 0.0.40
codegen_flags: <defaults>
</compile_context>

<pallas_src>
import numpy as np
import jax
import jax.numpy as jnp
from jax import lax
from jax.experimental import pallas as pl
from jax.experimental.pallas import tpu as pltpu


# -----------------------------------------------------------------------------
# Pallas kernel: whole HMPNN forward (input linears + n_layers message-passing
# layers) fused in a single VMEM-resident kernel.
# -----------------------------------------------------------------------------
def _hmpnn_kernel(x0_ref, x1_ref, b_ref, w_in_ref, w_lyr_ref, vec_ref,
                  y0_ref, y1_ref):
    f32 = jnp.float32
    bf16 = jnp.bfloat16
    TN_DIMS = (((0,), (0,)), ((), ()))        # contract dim 0 of both -> A^T @ B

    def mm(a, w):
        # bf16 x bf16 on the MXU, f32 accumulation.
        return jnp.dot(a.astype(bf16), w, preferred_element_type=f32)

    def sigmoid(z):
        # One EUP transcendental (tanh) instead of exp + reciprocal.
        return 0.5 * jnp.tanh(0.5 * z) + 0.5

    def vec(i):
        # Static row slice of the packed bias/BN slab -> (1, Hp) f32.
        return vec_ref[i:i + 1, :]

    B = b_ref[...]                                       # (Np, Ep) bf16, exact 0/1

    # Input linear projections (in_features -> hidden).
    x0 = mm(x0_ref[...], w_in_ref[0]) + vec(0)           # (Np, Hp) f32
    x1 = mm(x1_ref[...], w_in_ref[1]) + vec(1)           # (Ep, Hp) f32

    n_layers = w_lyr_ref.shape[0] // 3
    for l in range(n_layers):   # static, small (default 2) -> fully unrolled
        w_msg = w_lyr_ref[3 * l]                         # (Hp, Hp) bf16
        w_e2n_a = w_lyr_ref[3 * l + 1]
        w_e2n_b = w_lyr_ref[3 * l + 2]
        base = 2 + 6 * l

        # node -> hyperedge messaging: sigmoid(Linear(x0))
        node_msg = sigmoid(mm(x0, w_msg) + vec(base))                   # (Np, Hp)
        # aggregate node messages per hyperedge (sum): B^T @ node_msg,
        # fed as a transposed contraction (no Bt materialization).
        m_edge = lax.dot_general(B, node_msg.astype(bf16), TN_DIMS,
                                 preferred_element_type=f32)            # (Ep, Hp)
        # hyperedge -> node messaging: sigmoid(Linear(cat([x1, m_edge], -1)))
        # concat expressed as split matmul: cat @ W^T == x1 @ Wa + m_edge @ Wb
        edge_msg = sigmoid(mm(x1, w_e2n_a) + mm(m_edge, w_e2n_b)
                           + vec(base + 1))                             # (Ep, Hp)
        # aggregate hyperedge messages per node (sum): B @ edge_msg
        m_node = jnp.dot(B, edge_msg.astype(bf16),
                         preferred_element_type=f32)                    # (Np, Hp)
        # update: sigmoid(BatchNorm(x) + m)   (eval-mode BN folded to scale/shift)
        x0 = sigmoid(x0 * vec(base + 2) + vec(base + 3) + m_node)
        x1 = sigmoid(x1 * vec(base + 4) + vec(base + 5) + m_edge)

    y0_ref[...] = x0
    y1_ref[...] = x1


# -----------------------------------------------------------------------------
# Wrapper: pad to TPU-friendly shapes, pack parameters, call the kernel, slice
# outputs back to logical shapes.
# -----------------------------------------------------------------------------
def _round_up(x, m):
    return (x + m - 1) // m * m


def _pad2(a, rows, cols):
    return jnp.pad(a, ((0, rows - a.shape[0]), (0, cols - a.shape[1])))


def hmpnn_forward(x0, x1, incidence, params):
    f32, bf16 = jnp.float32, jnp.bfloat16
    n_nodes, in_ch = x0.shape
    n_edges = x1.shape[0]
    hidden = params["w_node"].shape[1]
    n_layers = params["w_msg"].shape[0]

    # Lane (last) axes -> 128 (hidden everywhere, n_edges as the lane axis of B);
    # sublane / contraction axes -> bf16 tile (16).  Zero padding is exact.
    Np = _round_up(n_nodes, 16)
    Ep = _round_up(n_edges, 128)
    Cp = _round_up(in_ch, 16)
    Hp = _round_up(hidden, 128)

    # Activations + incidence shipped in bf16 (quantized before every matmul anyway).
    x0_p = _pad2(x0.astype(f32), Np, Cp).astype(bf16)                 # (Np, Cp)
    x1_p = _pad2(x1.astype(f32), Ep, Cp).astype(bf16)                 # (Ep, Cp)
    b_p = _pad2(incidence.astype(f32), Np, Ep).astype(bf16)           # (Np, Ep) 0/1 exact

    # Pack weights: input projections and per-layer matrices into two bf16 slabs.
    w_in = jnp.stack([_pad2(params["w_node"], Cp, Hp),
                      _pad2(params["w_edge"], Cp, Hp)]).astype(bf16)  # (2, Cp, Hp)
    w_lyr = []
    for l in range(n_layers):
        w_lyr += [_pad2(params["w_msg"][l], Hp, Hp),
                  _pad2(params["w_e2n_a"][l], Hp, Hp),
                  _pad2(params["w_e2n_b"][l], Hp, Hp)]
    w_lyr = jnp.stack(w_lyr).astype(bf16)                             # (3L, Hp, Hp)

    # Pack all biases / BN scale+shift into one f32 slab: rows 0..1 are the input
    # projection biases, then 6 rows per layer.
    vec_rows = [_pad2(params["b_node"], 1, Hp), _pad2(params["b_edge"], 1, Hp)]
    for l in range(n_layers):
        vec_rows += [_pad2(params["b_msg"][l], 1, Hp),
                     _pad2(params["b_e2n"][l], 1, Hp),
                     _pad2(params["bn_node_scale"][l], 1, Hp),
                     _pad2(params["bn_node_shift"][l], 1, Hp),
                     _pad2(params["bn_edge_scale"][l], 1, Hp),
                     _pad2(params["bn_edge_shift"][l], 1, Hp)]
    vecs = jnp.concatenate(vec_rows, axis=0).astype(f32)              # (2+6L, Hp)

    inputs = (x0_p, x1_p, b_p, w_in, w_lyr, vecs)

    # Cost estimate for the XLA scheduler.
    out_bytes = (Np + Ep) * Hp * 4
    in_bytes = sum(int(a.size) * a.dtype.itemsize for a in inputs)
    flops = (2 * (Np + Ep) * Cp * Hp
             + n_layers * (2 * Np * Hp * Hp        # node->edge linear
                           + 4 * Ep * Hp * Hp      # split concat linear
                           + 4 * Np * Ep * Hp))    # both incidence aggregations
    transcendentals = n_layers * 2 * (Np + Ep) * Hp

    # VMEM limit from the actual padded footprint + headroom, capped per generation.
    inter_bytes = 10 * (Np + Ep) * Hp * 4          # rough f32 intermediate estimate
    footprint = in_bytes + out_bytes + inter_bytes
    try:
        info = pltpu.get_tpu_info()
        vmem_cap = int(0.9 * getattr(info, "vmem_capacity_bytes", 64 * 1024 * 1024))
    except Exception:
        vmem_cap = 64 * 1024 * 1024                # safe on v5e/v6e/v7x
    vmem_limit = min(vmem_cap, max(32 * 1024 * 1024, 2 * footprint + (4 << 20)))

    vmem_spec = pl.BlockSpec(memory_space=pltpu.MemorySpace.VMEM)
    y0p, y1p = pl.pallas_call(
        _hmpnn_kernel,
        out_shape=(jax.ShapeDtypeStruct((Np, Hp), f32),
                   jax.ShapeDtypeStruct((Ep, Hp), f32)),
        in_specs=[vmem_spec] * len(inputs),
        out_specs=(vmem_spec, vmem_spec),
        cost_estimate=pl.CostEstimate(flops=int(flops),
                                      transcendentals=int(transcendentals),
                                      bytes_accessed=int(in_bytes + out_bytes)),
        compiler_params=pltpu.CompilerParams(vmem_limit_bytes=int(vmem_limit)),
    )(*inputs)

    return y0p[:n_nodes, :hidden], y1p[:n_edges, :hidden]


# -----------------------------------------------------------------------------
# Deterministic parameter construction (matches the PyTorch module shapes).
# -----------------------------------------------------------------------------
def init_params(key, in_channels, hidden_channels, n_layers=2, eps=1e-5):
    def uniform(k, shape, fan_in):
        bound = 1.0 / np.sqrt(fan_in)
        return jax.random.uniform(k, shape, jnp.float32, -bound, bound)

    keys = iter(jax.random.split(key, 8 + 8 * n_layers))
    p = {}
    # HMPNN.linear_node / linear_edge : Linear(in_channels, hidden)
    p["w_node"] = uniform(next(keys), (in_channels, hidden_channels), in_channels)
    p["b_node"] = uniform(next(keys), (1, hidden_channels), in_channels)
    p["w_edge"] = uniform(next(keys), (in_channels, hidden_channels), in_channels)
    p["b_edge"] = uniform(next(keys), (1, hidden_channels), in_channels)

    w_msg, b_msg, w_e2n_a, w_e2n_b, b_e2n = [], [], [], [], []
    for _ in range(n_layers):
        # node->hyperedge messaging: Linear(hidden, hidden)
        w_msg.append(uniform(next(keys), (hidden_channels, hidden_channels), hidden_channels))
        b_msg.append(uniform(next(keys), (1, hidden_channels), hidden_channels))
        # hyperedge->node messaging: Linear(2*hidden, hidden), split into the
        # x_1 block (a) and the aggregated-message block (b).
        w_e2n_a.append(uniform(next(keys), (hidden_channels, hidden_channels), 2 * hidden_channels))
        w_e2n_b.append(uniform(next(keys), (hidden_channels, hidden_channels), 2 * hidden_channels))
        b_e2n.append(uniform(next(keys), (1, hidden_channels), 2 * hidden_channels))

    p["w_msg"] = jnp.stack(w_msg)        # (L, H, H)
    p["b_msg"] = jnp.stack(b_msg)        # (L, 1, H)
    p["w_e2n_a"] = jnp.stack(w_e2n_a)    # (L, H, H)
    p["w_e2n_b"] = jnp.stack(w_e2n_b)    # (L, H, H)
    p["b_e2n"] = jnp.stack(b_e2n)        # (L, 1, H)

    # BatchNorm1d defaults (eval): gamma=1, beta=0, running_mean=0, running_var=1
    scale = jnp.full((n_layers, 1, hidden_channels), 1.0 / np.sqrt(1.0 + eps), jnp.float32)
    shift = jnp.zeros((n_layers, 1, hidden_channels), jnp.float32)
    p["bn_node_scale"], p["bn_node_shift"] = scale, shift
    p["bn_edge_scale"], p["bn_edge_shift"] = scale, shift
    return p


# -----------------------------------------------------------------------------
# Pure-JAX reference with the SAME precision choices (bf16 weights/incidence/
# activations at the matmul inputs, f32 accumulation, f32 epilogue).
# -----------------------------------------------------------------------------
def hmpnn_reference(x0, x1, B, p):
    f32, bf16 = jnp.float32, jnp.bfloat16

    def mm(a, w):
        return jnp.dot(a.astype(bf16), w.astype(bf16), preferred_element_type=f32)

    def sig(z):
        return 1.0 / (1.0 + jnp.exp(-z))

    Bb = B.astype(bf16)
    x0 = mm(x0, p["w_node"]) + p["b_node"]
    x1 = mm(x1, p["w_edge"]) + p["b_edge"]
    for l in range(p["w_msg"].shape[0]):
        node_msg = sig(mm(x0, p["w_msg"][l]) + p["b_msg"][l])
        m_edge = jnp.dot(Bb.T, node_msg.astype(bf16), preferred_element_type=f32)
        edge_msg = sig(mm(x1, p["w_e2n_a"][l]) + mm(m_edge, p["w_e2n_b"][l]) + p["b_e2n"][l])
        m_node = jnp.dot(Bb, edge_msg.astype(bf16), preferred_element_type=f32)
        x0 = sig(x0 * p["bn_node_scale"][l] + p["bn_node_shift"][l] + m_node)
        x1 = sig(x1 * p["bn_edge_scale"][l] + p["bn_edge_shift"][l] + m_edge)
    return x0, x1


if __name__ == "__main__":
    n_nodes, n_edges = 16, 12
    in_channels, hidden_channels, n_layers = 8, 32, 2

    key = jax.random.PRNGKey(0)
    k_x0, k_x1, k_inc, k_params = jax.random.split(key, 4)

    x_0 = jax.random.normal(k_x0, (n_nodes, in_channels), jnp.float32)
    x_1 = jax.random.normal(k_x1, (n_edges, in_channels), jnp.float32)
    # dense 0/1 incidence matrix B1 (sparse COO in PyTorch -> dense here)
    incidence_1 = (jax.random.uniform(k_inc, (n_nodes, n_edges)) < 0.3).astype(jnp.float32)

    params = init_params(k_params, in_channels, hidden_channels, n_layers)

    y0, y1 = hmpnn_forward(x_0, x_1, incidence_1, params)
    jax.block_until_ready((y0, y1))

    r0, r1 = hmpnn_reference(x_0, x_1, incidence_1, params)
    np.testing.assert_allclose(np.asarray(y0), np.asarray(r0), rtol=5e-4, atol=5e-4)
    np.testing.assert_allclose(np.asarray(y1), np.asarray(r1), rtol=5e-4, atol=5e-4)
    assert y0.shape == (n_nodes, hidden_channels) and y1.shape == (n_edges, hidden_channels)

    print("KERNEL_OK")
</pallas_src>

<mosaic_0001>
module attributes {stable_mosaic.version = 11 : i64} {
  func.func @_hmpnn_kernel(%arg0: memref<16x16xbf16, #tpu.memory_space<vmem>>, %arg1: memref<128x16xbf16, #tpu.memory_space<vmem>>, %arg2: memref<16x128xbf16, #tpu.memory_space<vmem>>, %arg3: memref<2x16x128xbf16, #tpu.memory_space<vmem>>, %arg4: memref<6x128x128xbf16, #tpu.memory_space<vmem>>, %arg5: memref<14x128xf32, #tpu.memory_space<vmem>>, %arg6: memref<16x128xf32, #tpu.memory_space<vmem>>, %arg7: memref<128x128xf32, #tpu.memory_space<vmem>>) attributes {dimension_semantics = [], scalar_prefetch = 0 : i64, scratch_operands = 0 : i64, tpu.core_type = #tpu.core_type<tc>} {
    %c0 = arith.constant 0 : index
    %c0_0 = arith.constant 0 : index
    %0 = vector.load %arg2[%c0, %c0_0] : memref<16x128xbf16, #tpu.memory_space<vmem>>, vector<16x128xbf16>
    %c0_1 = arith.constant 0 : index
    %c0_2 = arith.constant 0 : index
    %1 = vector.load %arg0[%c0_1, %c0_2] : memref<16x16xbf16, #tpu.memory_space<vmem>>, vector<16x16xbf16>
    %c0_3 = arith.constant 0 : index
    %c0_4 = arith.constant 0 : index
    %c0_5 = arith.constant 0 : index
    %2 = vector.load %arg3[%c0_3, %c0_4, %c0_5] : memref<2x16x128xbf16, #tpu.memory_space<vmem>>, vector<1x16x128xbf16>
    %3 = vector.shape_cast %2 : vector<1x16x128xbf16> to vector<16x128xbf16>
    %cst = arith.constant dense<0.000000e+00> : vector<16x128xf32>
    %4 = tpu.matmul %1, %3, %cst {dimension_numbers = #tpu.dot_dimension_numbers<[1], [0], [0], [1], [0, 0, 1, 1], [], []>} : vector<16x16xbf16>, vector<16x128xbf16>, vector<16x128xf32> -> vector<16x128xf32>
    %c0_6 = arith.constant 0 : index
    %c0_7 = arith.constant 0 : index
    %5 = vector.load %arg5[%c0_6, %c0_7] : memref<14x128xf32, #tpu.memory_space<vmem>>, vector<1x128xf32>
    %6 = vector.broadcast %5 : vector<1x128xf32> to vector<16x128xf32>
    %7 = arith.addf %4, %6 : vector<16x128xf32>
    %c0_8 = arith.constant 0 : index
    %c0_9 = arith.constant 0 : index
    %8 = vector.load %arg1[%c0_8, %c0_9] : memref<128x16xbf16, #tpu.memory_space<vmem>>, vector<128x16xbf16>
    %c1 = arith.constant 1 : index
    %c0_10 = arith.constant 0 : index
    %c0_11 = arith.constant 0 : index
    %9 = vector.load %arg3[%c1, %c0_10, %c0_11] : memref<2x16x128xbf16, #tpu.memory_space<vmem>>, vector<1x16x128xbf16>
    %10 = vector.shape_cast %9 : vector<1x16x128xbf16> to vector<16x128xbf16>
    %cst_12 = arith.constant dense<0.000000e+00> : vector<128x128xf32>
    %11 = tpu.matmul %8, %10, %cst_12 {dimension_numbers = #tpu.dot_dimension_numbers<[1], [0], [0], [1], [0, 0, 1, 1], [], []>} : vector<128x16xbf16>, vector<16x128xbf16>, vector<128x128xf32> -> vector<128x128xf32>
    %c1_13 = arith.constant 1 : index
    %c0_14 = arith.constant 0 : index
    %12 = vector.load %arg5[%c1_13, %c0_14] : memref<14x128xf32, #tpu.memory_space<vmem>>, vector<1x128xf32>
    %13 = vector.broadcast %12 : vector<1x128xf32> to vector<128x128xf32>
    %14 = arith.addf %11, %13 : vector<128x128xf32>
    %c0_15 = arith.constant 0 : index
    %c0_16 = arith.constant 0 : index
    %c0_17 = arith.constant 0 : index
    %15 = vector.load %arg4[%c0_15, %c0_16, %c0_17] : memref<6x128x128xbf16, #tpu.memory_space<vmem>>, vector<1x128x128xbf16>
    %16 = vector.shape_cast %15 : vector<1x128x128xbf16> to vector<128x128xbf16>
    %c1_18 = arith.constant 1 : index
    %c0_19 = arith.constant 0 : index
    %c0_20 = arith.constant 0 : index
    %17 = vector.load %arg4[%c1_18, %c0_19, %c0_20] : memref<6x128x128xbf16, #tpu.memory_space<vmem>>, vector<1x128x128xbf16>
    %18 = vector.shape_cast %17 : vector<1x128x128xbf16> to vector<128x128xbf16>
    %c2 = arith.constant 2 : index
    %c0_21 = arith.constant 0 : index
    %c0_22 = arith.constant 0 : index
    %19 = vector.load %arg4[%c2, %c0_21, %c0_22] : memref<6x128x128xbf16, #tpu.memory_space<vmem>>, vector<1x128x128xbf16>
    %20 = vector.shape_cast %19 : vector<1x128x128xbf16> to vector<128x128xbf16>
    %21 = arith.truncf %7 : vector<16x128xf32> to vector<16x128xbf16>
    %cst_23 = arith.constant dense<0.000000e+00> : vector<16x128xf32>
    %22 = tpu.matmul %21, %16, %cst_23 {dimension_numbers = #tpu.dot_dimension_numbers<[1], [0], [0], [1], [0, 0, 1, 1], [], []>} : vector<16x128xbf16>, vector<128x128xbf16>, vector<16x128xf32> -> vector<16x128xf32>
    %c2_24 = arith.constant 2 : index
    %c0_25 = arith.constant 0 : index
    %23 = vector.load %arg5[%c2_24, %c0_25] : memref<14x128xf32, #tpu.memory_space<vmem>>, vector<1x128xf32>
    %24 = vector.broadcast %23 : vector<1x128xf32> to vector<16x128xf32>
    %25 = arith.addf %22, %24 : vector<16x128xf32>
    %cst_26 = arith.constant 5.000000e-01 : f32
    %26 = vector.broadcast %cst_26 : f32 to vector<16x128xf32>
    %27 = arith.mulf %26, %25 : vector<16x128xf32>
    %28 = math.tanh %27 : vector<16x128xf32>
    %cst_27 = arith.constant 5.000000e-01 : f32
    %29 = vector.broadcast %cst_27 : f32 to vector<16x128xf32>
    %30 = arith.mulf %29, %28 : vector<16x128xf32>
    %cst_28 = arith.constant 5.000000e-01 : f32
    %31 = vector.broadcast %cst_28 : f32 to vector<16x128xf32>
    %32 = arith.addf %30, %31 : vector<16x128xf32>
    %33 = arith.truncf %32 : vector<16x128xf32> to vector<16x128xbf16>
    %cst_29 = arith.constant dense<0.000000e+00> : vector<128x128xf32>
    %34 = tpu.matmul %0, %33, %cst_29 {dimension_numbers = #tpu.dot_dimension_numbers<[0], [0], [1], [1], [0, 1, 1, 1], [], []>} : vector<16x128xbf16>, vector<16x128xbf16>, vector<128x128xf32> -> vector<128x128xf32>
    %35 = arith.truncf %14 : vector<128x128xf32> to vector<128x128xbf16>
    %cst_30 = arith.constant dense<0.000000e+00> : vector<128x128xf32>
    %36 = tpu.matmul %35, %18, %cst_30 {dimension_numbers = #tpu.dot_dimension_numbers<[1], [0], [0], [1], [0, 0, 1, 1], [], []>} : vector<128x128xbf16>, vector<128x128xbf16>, vector<128x128xf32> -> vector<128x128xf32>
    %37 = arith.truncf %34 : vector<128x128xf32> to vector<128x128xbf16>
    %cst_31 = arith.constant dense<0.000000e+00> : vector<128x128xf32>
    %38 = tpu.matmul %37, %20, %cst_31 {dimension_numbers = #tpu.dot_dimension_numbers<[1], [0], [0], [1], [0, 0, 1, 1], [], []>} : vector<128x128xbf16>, vector<128x128xbf16>, vector<128x128xf32> -> vector<128x128xf32>
    %39 = arith.addf %36, %38 : vector<128x128xf32>
    %c3 = arith.constant 3 : index
    %c0_32 = arith.constant 0 : index
    %40 = vector.load %arg5[%c3, %c0_32] : memref<14x128xf32, #tpu.memory_space<vmem>>, vector<1x128xf32>
    %41 = vector.broadcast %40 : vector<1x128xf32> to vector<128x128xf32>
    %42 = arith.addf %39, %41 : vector<128x128xf32>
    %cst_33 = arith.constant 5.000000e-01 : f32
    %43 = vector.broadcast %cst_33 : f32 to vector<128x128xf32>
    %44 = arith.mulf %43, %42 : vector<128x128xf32>
    %45 = math.tanh %44 : vector<128x128xf32>
    %cst_34 = arith.constant 5.000000e-01 : f32
    %46 = vector.broadcast %cst_34 : f32 to vector<128x128xf32>
    %47 = arith.mulf %46, %45 : vector<128x128xf32>
    %cst_35 = arith.constant 5.000000e-01 : f32
    %48 = vector.broadcast %cst_35 : f32 to vector<128x128xf32>
    %49 = arith.addf %47, %48 : vector<128x128xf32>
    %50 = arith.truncf %49 : vector<128x128xf32> to vector<128x128xbf16>
    %cst_36 = arith.constant dense<0.000000e+00> : vector<16x128xf32>
    %51 = tpu.matmul %0, %50, %cst_36 {dimension_numbers = #tpu.dot_dimension_numbers<[1], [0], [0], [1], [0, 0, 1, 1], [], []>} : vector<16x128xbf16>, vector<128x128xbf16>, vector<16x128xf32> -> vector<16x128xf32>
    %c4 = arith.constant 4 : index
    %c0_37 = arith.constant 0 : index
    %52 = vector.load %arg5[%c4, %c0_37] : memref<14x128xf32, #tpu.memory_space<vmem>>, vector<1x128xf32>
    %53 = vector.broadcast %52 : vector<1x128xf32> to vector<16x128xf32>
    %54 = arith.mulf %7, %53 : vector<16x128xf32>
    %c5 = arith.constant 5 : index
    %c0_38 = arith.constant 0 : index
    %55 = vector.load %arg5[%c5, %c0_38] : memref<14x128xf32, #tpu.memory_space<vmem>>, vector<1x128xf32>
    %56 = vector.broadcast %55 : vector<1x128xf32> to vector<16x128xf32>
    %57 = arith.addf %54, %56 : vector<16x128xf32>
    %58 = arith.addf %57, %51 : vector<16x128xf32>
    %cst_39 = arith.constant 5.000000e-01 : f32
    %59 = vector.broadcast %cst_39 : f32 to vector<16x128xf32>
    %60 = arith.mulf %59, %58 : vector<16x128xf32>
    %61 = math.tanh %60 : vector<16x128xf32>
    %cst_40 = arith.constant 5.000000e-01 : f32
    %62 = vector.broadcast %cst_40 : f32 to vector<16x128xf32>
    %63 = arith.mulf %62, %61 : vector<16x128xf32>
    %cst_41 = arith.constant 5.000000e-01 : f32
    %64 = vector.broadcast %cst_41 : f32 to vector<16x128xf32>
    %65 = arith.addf %63, %64 : vector<16x128xf32>
    %c6 = arith.constant 6 : index
    %c0_42 = arith.constant 0 : index
    %66 = vector.load %arg5[%c6, %c0_42] : memref<14x128xf32, #tpu.memory_space<vmem>>, vector<1x128xf32>
    %67 = vector.broadcast %66 : vector<1x128xf32> to vector<128x128xf32>
    %68 = arith.mulf %14, %67 : vector<128x128xf32>
    %c7 = arith.constant 7 : index
    %c0_43 = arith.constant 0 : index
    %69 = vector.load %arg5[%c7, %c0_43] : memref<14x128xf32, #tpu.memory_space<vmem>>, vector<1x128xf32>
    %70 = vector.broadcast %69 : vector<1x128xf32> to vector<128x128xf32>
    %71 = arith.addf %68, %70 : vector<128x128xf32>
    %72 = arith.addf %71, %34 : vector<128x128xf32>
    %cst_44 = arith.constant 5.000000e-01 : f32
    %73 = vector.broadcast %cst_44 : f32 to vector<128x128xf32>
    %74 = arith.mulf %73, %72 : vector<128x128xf32>
    %75 = math.tanh %74 : vector<128x128xf32>
    %cst_45 = arith.constant 5.000000e-01 : f32
    %76 = vector.broadcast %cst_45 : f32 to vector<128x128xf32>
    %77 = arith.mulf %76, %75 : vector<128x128xf32>
    %cst_46 = arith.constant 5.000000e-01 : f32
    %78 = vector.broadcast %cst_46 : f32 to vector<128x128xf32>
    %79 = arith.addf %77, %78 : vector<128x128xf32>
    %c3_47 = arith.constant 3 : index
    %c0_48 = arith.constant 0 : index
    %c0_49 = arith.constant 0 : index
    %80 = vector.load %arg4[%c3_47, %c0_48, %c0_49] : memref<6x128x128xbf16, #tpu.memory_space<vmem>>, vector<1x128x128xbf16>
    %81 = vector.shape_cast %80 : vector<1x128x128xbf16> to vector<128x128xbf16>
    %c4_50 = arith.constant 4 : index
    %c0_51 = arith.constant 0 : index
    %c0_52 = arith.constant 0 : index
    %82 = vector.load %arg4[%c4_50, %c0_51, %c0_52] : memref<6x128x128xbf16, #tpu.memory_space<vmem>>, vector<1x128x128xbf16>
    %83 = vector.shape_cast %82 : vector<1x128x128xbf16> to vector<128x128xbf16>
    %c5_53 = arith.constant 5 : index
    %c0_54 = arith.constant 0 : index
    %c0_55 = arith.constant 0 : index
    %84 = vector.load %arg4[%c5_53, %c0_54, %c0_55] : memref<6x128x128xbf16, #tpu.memory_space<vmem>>, vector<1x128x128xbf16>
    %85 = vector.shape_cast %84 : vector<1x128x128xbf16> to vector<128x128xbf16>
    %86 = arith.truncf %65 : vector<16x128xf32> to vector<16x128xbf16>
    %cst_56 = arith.constant dense<0.000000e+00> : vector<16x128xf32>
    %87 = tpu.matmul %86, %81, %cst_56 {dimension_numbers = #tpu.dot_dimension_numbers<[1], [0], [0], [1], [0, 0, 1, 1], [], []>} : vector<16x128xbf16>, vector<128x128xbf16>, vector<16x128xf32> -> vector<16x128xf32>
    %c8 = arith.constant 8 : index
    %c0_57 = arith.constant 0 : index
    %88 = vector.load %arg5[%c8, %c0_57] : memref<14x128xf32, #tpu.memory_space<vmem>>, vector<1x128xf32>
    %89 = vector.broadcast %88 : vector<1x128xf32> to vector<16x128xf32>
    %90 = arith.addf %87, %89 : vector<16x128xf32>
    %cst_58 = arith.constant 5.000000e-01 : f32
    %91 = vector.broadcast %cst_58 : f32 to vector<16x128xf32>
    %92 = arith.mulf %91, %90 : vector<16x128xf32>
    %93 = math.tanh %92 : vector<16x128xf32>
    %cst_59 = arith.constant 5.000000e-01 : f32
    %94 = vector.broadcast %cst_59 : f32 to vector<16x128xf32>
    %95 = arith.mulf %94, %93 : vector<16x128xf32>
    %cst_60 = arith.constant 5.000000e-01 : f32
    %96 = vector.broadcast %cst_60 : f32 to vector<16x128xf32>
    %97 = arith.addf %95, %96 : vector<16x128xf32>
    %98 = arith.truncf %97 : vector<16x128xf32> to vector<16x128xbf16>
    %cst_61 = arith.constant dense<0.000000e+00> : vector<128x128xf32>
    %99 = tpu.matmul %0, %98, %cst_61 {dimension_numbers = #tpu.dot_dimension_numbers<[0], [0], [1], [1], [0, 1, 1, 1], [], []>} : vector<16x128xbf16>, vector<16x128xbf16>, vector<128x128xf32> -> vector<128x128xf32>
    %100 = arith.truncf %79 : vector<128x128xf32> to vector<128x128xbf16>
    %cst_62 = arith.constant dense<0.000000e+00> : vector<128x128xf32>
    %101 = tpu.matmul %100, %83, %cst_62 {dimension_numbers = #tpu.dot_dimension_numbers<[1], [0], [0], [1], [0, 0, 1, 1], [], []>} : vector<128x128xbf16>, vector<128x128xbf16>, vector<128x128xf32> -> vector<128x128xf32>
    %102 = arith.truncf %99 : vector<128x128xf32> to vector<128x128xbf16>
    %cst_63 = arith.constant dense<0.000000e+00> : vector<128x128xf32>
    %103 = tpu.matmul %102, %85, %cst_63 {dimension_numbers = #tpu.dot_dimension_numbers<[1], [0], [0], [1], [0, 0, 1, 1], [], []>} : vector<128x128xbf16>, vector<128x128xbf16>, vector<128x128xf32> -> vector<128x128xf32>
    %104 = arith.addf %101, %103 : vector<128x128xf32>
    %c9 = arith.constant 9 : index
    %c0_64 = arith.constant 0 : index
    %105 = vector.load %arg5[%c9, %c0_64] : memref<14x128xf32, #tpu.memory_space<vmem>>, vector<1x128xf32>
    %106 = vector.broadcast %105 : vector<1x128xf32> to vector<128x128xf32>
    %107 = arith.addf %104, %106 : vector<128x128xf32>
    %cst_65 = arith.constant 5.000000e-01 : f32
    %108 = vector.broadcast %cst_65 : f32 to vector<128x128xf32>
    %109 = arith.mulf %108, %107 : vector<128x128xf32>
    %110 = math.tanh %109 : vector<128x128xf32>
    %cst_66 = arith.constant 5.000000e-01 : f32
    %111 = vector.broadcast %cst_66 : f32 to vector<128x128xf32>
    %112 = arith.mulf %111, %110 : vector<128x128xf32>
    %cst_67 = arith.constant 5.000000e-01 : f32
    %113 = vector.broadcast %cst_67 : f32 to vector<128x128xf32>
    %114 = arith.addf %112, %113 : vector<128x128xf32>
    %115 = arith.truncf %114 : vector<128x128xf32> to vector<128x128xbf16>
    %cst_68 = arith.constant dense<0.000000e+00> : vector<16x128xf32>
    %116 = tpu.matmul %0, %115, %cst_68 {dimension_numbers = #tpu.dot_dimension_numbers<[1], [0], [0], [1], [0, 0, 1, 1], [], []>} : vector<16x128xbf16>, vector<128x128xbf16>, vector<16x128xf32> -> vector<16x128xf32>
    %c10 = arith.constant 10 : index
    %c0_69 = arith.constant 0 : index
    %117 = vector.load %arg5[%c10, %c0_69] : memref<14x128xf32, #tpu.memory_space<vmem>>, vector<1x128xf32>
    %118 = vector.broadcast %117 : vector<1x128xf32> to vector<16x128xf32>
    %119 = arith.mulf %65, %118 : vector<16x128xf32>
    %c11 = arith.constant 11 : index
    %c0_70 = arith.constant 0 : index
    %120 = vector.load %arg5[%c11, %c0_70] : memref<14x128xf32, #tpu.memory_space<vmem>>, vector<1x128xf32>
    %121 = vector.broadcast %120 : vector<1x128xf32> to vector<16x128xf32>
    %122 = arith.addf %119, %121 : vector<16x128xf32>
    %123 = arith.addf %122, %116 : vector<16x128xf32>
    %cst_71 = arith.constant 5.000000e-01 : f32
    %124 = vector.broadcast %cst_71 : f32 to vector<16x128xf32>
    %125 = arith.mulf %124, %123 : vector<16x128xf32>
    %126 = math.tanh %125 : vector<16x128xf32>
    %cst_72 = arith.constant 5.000000e-01 : f32
    %127 = vector.broadcast %cst_72 : f32 to vector<16x128xf32>
    %128 = arith.mulf %127, %126 : vector<16x128xf32>
    %cst_73 = arith.constant 5.000000e-01 : f32
    %129 = vector.broadcast %cst_73 : f32 to vector<16x128xf32>
    %130 = arith.addf %128, %129 : vector<16x128xf32>
    %c12 = arith.constant 12 : index
    %c0_74 = arith.constant 0 : index
    %131 = vector.load %arg5[%c12, %c0_74] : memref<14x128xf32, #tpu.memory_space<vmem>>, vector<1x128xf32>
    %132 = vector.broadcast %131 : vector<1x128xf32> to vector<128x128xf32>
    %133 = arith.mulf %79, %132 : vector<128x128xf32>
    %c13 = arith.constant 13 : index
    %c0_75 = arith.constant 0 : index
    %134 = vector.load %arg5[%c13, %c0_75] : memref<14x128xf32, #tpu.memory_space<vmem>>, vector<1x128xf32>
    %135 = vector.broadcast %134 : vector<1x128xf32> to vector<128x128xf32>
    %136 = arith.addf %133, %135 : vector<128x128xf32>
    %137 = arith.addf %136, %99 : vector<128x128xf32>
    %cst_76 = arith.constant 5.000000e-01 : f32
    %138 = vector.broadcast %cst_76 : f32 to vector<128x128xf32>
    %139 = arith.mulf %138, %137 : vector<128x128xf32>
    %140 = math.tanh %139 : vector<128x128xf32>
    %cst_77 = arith.constant 5.000000e-01 : f32
    %141 = vector.broadcast %cst_77 : f32 to vector<128x128xf32>
    %142 = arith.mulf %141, %140 : vector<128x128xf32>
    %cst_78 = arith.constant 5.000000e-01 : f32
    %143 = vector.broadcast %cst_78 : f32 to vector<128x128xf32>
    %144 = arith.addf %142, %143 : vector<128x128xf32>
    %c0_79 = arith.constant 0 : index
    %c0_80 = arith.constant 0 : index
    %145 = vector.load %arg6[%c0_79, %c0_80] : memref<16x128xf32, #tpu.memory_space<vmem>>, vector<16x128xf32>
    tpu.vector_store %arg6[%c0_79, %c0_80], %130 {strides = array<i32>} : memref<16x128xf32, #tpu.memory_space<vmem>>, vector<16x128xf32>,
    %c0_81 = arith.constant 0 : index
    %c0_82 = arith.constant 0 : index
    %146 = vector.load %arg7[%c0_81, %c0_82] : memref<128x128xf32, #tpu.memory_space<vmem>>, vector<128x128xf32>
    tpu.vector_store %arg7[%c0_81, %c0_82], %144 {strides = array<i32>} : memref<128x128xf32, #tpu.memory_space<vmem>>, vector<128x128xf32>,
    return
  }
}

</mosaic_0001>

<llo_original>
// kernel: tpu_custom_call.1
$region0: #{tpu_custom_call.1}
  #allocation0 [shape = 'u32[]', space=smem, size = 0x4, offset = 0x4, fixed_abs, tag = 'smem constant byte address 0x4 - core index']
  #allocation1 [shape = 'u32[144,128]{1,0:T(1,128)}', space=vmem, size = 0x12000, scoped, tag = 'internal scratch']
  %s0 = inlined_call_operand.vmem [shape: bf16[16,16], index: 0, kind: input, shape index: {}]
  %s1 = inlined_call_operand.vmem [shape: bf16[128,16], index: 1, kind: input, shape index: {}]
  %s2 = inlined_call_operand.vmem [shape: bf16[16,128], index: 2, kind: input, shape index: {}]
  %s3 = inlined_call_operand.vmem [shape: bf16[2,16,128], index: 3, kind: input, shape index: {}]
  %s4 = inlined_call_operand.hbm [shape: bf16[6,128,128], index: 4, kind: input, shape index: {}]
  %s5 = inlined_call_operand.vmem [shape: f32[14,128], index: 5, kind: input, shape index: {}]
  %s6 = inlined_call_operand.hbm [shape: f32[16,128], index: 6, kind: output, shape index: {0}]
  %s7 = inlined_call_operand.hbm [shape: f32[128,128], index: 7, kind: output, shape index: {1}]
  %8 = xla_tuple %s6, %s7
  %s9 = sld [smem:[#allocation0]]
  $region46: #{tpu_custom_call.1} parent=0
    _
  %s11 = ssub.s32 1, %s9
  %s12 = scalar_select 0, %s11, %s9
  $region1: #{tpu_custom_call.1} parent=0
    #allocation2 [shape = 'u8[196608]{0}', space=vmem, size = 0x30000, scoped, tag = 'input window, operand 4, single buffered']
    #allocation3 [shape = 's32[1]{0}', space=sflag, size = 0x4, scoped, tag = 'scoped memory for tpu_custom_call.1']
    #allocation4 [shape = 's32[1]{0}', space=sflag, size = 0x4, scoped, tag = 'scoped memory for tpu_custom_call.1']
    #allocation5 [shape = 'u8[8192]{0}', space=vmem, size = 0x2000, scoped, tag = 'output window, operand 0, single buffered']
    #allocation6 [shape = 'u8[65536]{0}', space=vmem, size = 0x10000, scoped, tag = 'output window, operand 1, single buffered']
    #allocation7 [shape = 's32[1]{0}', space=sflag, size = 0x4, scoped, tag = 'scoped memory for tpu_custom_call.1']
    %13 = vsyncpa [#allocation3], 0
    %14 = vsyncpa [#allocation4], 0
    %15 = vsyncpa [#allocation7], 0
    // Predicated region
    $region2: #{tpu_custom_call.1} parent=1 // pred_check
      _
    $region3: #{tpu_custom_call.1} parent=1 // pred_check_branch
      %17 = sbr.rel (0) target = $region5
    $region4: #{tpu_custom_call.1} parent=1 // pred_region
      _
    $region5: #{tpu_custom_call.1} parent=1 // pred_fallthru
      _
    // Predicated region
    $region6: #{tpu_custom_call.1} parent=1 // pred_check
      _
    $region7: #{tpu_custom_call.1} parent=1 // pred_check_branch
      %19 = sbr.rel (0) target = $region9
    $region8: #{tpu_custom_call.1} parent=1 // pred_region
      _
    $region9: #{tpu_custom_call.1} parent=1 // pred_fallthru
      _
    // Predicated region
    $region10: #{tpu_custom_call.1} parent=1 // pred_check
      _
    $region11: #{tpu_custom_call.1} parent=1 // pred_check_branch
      %21 = sbr.rel (0) target = $region13
    $region12: #{tpu_custom_call.1} parent=1 // pred_region
      _
    $region13: #{tpu_custom_call.1} parent=1 // pred_fallthru
      _
    // Predicated region
    $region14: #{tpu_custom_call.1} parent=1 // pred_check
      _
    $region15: #{tpu_custom_call.1} parent=1 // pred_check_branch
      %23 = sbr.rel (0) target = $region17
    $region16: #{tpu_custom_call.1} parent=1 // pred_region
      _
    $region17: #{tpu_custom_call.1} parent=1 // pred_fallthru
      _
    // Predicated region
    $region18: #{tpu_custom_call.1} parent=1 // pred_check
      _
    $region19: #{tpu_custom_call.1} parent=1 // pred_check_branch
      %25 = sbr.rel (0) target = $region21
    $region20: #{tpu_custom_call.1} parent=1 // pred_region
      %s27 = ssub.s32 6144, 6144
      %28 = vsyncadd [#allocation3], %s27
      %s29 = sshll.u32 [#allocation2], 4
      %s30 = int_to_ptr.vmem [resolvable:$true] %s29
      %35 = dma.hbm_to_vmem [thread:$0]  %s4, 6144, %s30, [#allocation3], 64, 64, 4
    $region21: #{tpu_custom_call.1} parent=1 // pred_fallthru
      _
    // Predicated region
    $region22: #{tpu_custom_call.1} parent=1 // pred_check
      _
    $region23: #{tpu_custom_call.1} parent=1 // pred_check_branch
      %37 = sbr.rel (0) target = $region25
    $region24: #{tpu_custom_call.1} parent=1 // pred_region
      _
    $region25: #{tpu_custom_call.1} parent=1 // pred_fallthru
      _
    // Predicated region
    $region26: #{tpu_custom_call.1} parent=1 // pred_check
      _
    $region27: #{tpu_custom_call.1} parent=1 // pred_check_branch
      %39 = sbr.rel (0) target = $region29
    $region28: #{tpu_custom_call.1} parent=1 // pred_region
      %40 = dma.done [#allocation3], 6144
    $region29: #{tpu_custom_call.1} parent=1 // pred_fallthru
      _
    %v42 = vld [vmem:[%s2] sm:$0xf]
    %v43 = vld [vmem:[%s2 + $0x4] sm:$0xf]
    %v44 = vld [vmem:[%s0] sm:$0xf]
    %v45 = vld [vmem:[%s0 + $0x4] sm:$0xf]
    %v46 = vld [vmem:[%s3] sm:$0xf]
    %v47 = vld [vmem:[%s3 + $0x4] sm:$0xf]
    %v48 = vld [vmem:[%s5] sm:$0x1]
    %v49 = vlaneseq
    %v50 = vshrl.u32 %v49, 7
    %v51 = vsub.s32 0, %v50
    %v52 = vrot.slane %v48, %v51
    %v55 = vunpack.c.l.b16 %v44
    %v56 = vunpack.c.l.b16 %v45
    %v57 = vpack.c.b16 %v56, %v55
    %v60 = vunpack.c.l.b16 %v46
    %v61 = vunpack.c.l.b16 %v47
    %v62 = vpack.c.b16 %v61, %v60
    %vm64 = vcmask 130048
    %v66 = vsel %vm64, %v57, 0
    %68 = vmatprep.subr.bf16.mxu0 0
    %69 = vmatpush1.bf16.msra.mxu0 0
    %70 = vmatprep.subr.bf16.mxu0 0
    %71 = vmatpush1.bf16.msra.mxu0 0
    %72 = vmatprep.subr.bf16.mxu0 0
    %73 = vmatpush1.bf16.msra.mxu0 0
    %74 = vmatprep.subr.bf16.mxu0 0
    %75 = vmatpush1.bf16.msra.mxu0 0
    %76 = vmatprep.subr.bf16.mxu0 0
    %77 = vmatpush1.bf16.msra.mxu0 0
    %78 = vmatprep.subr.bf16.mxu0 0
    %79 = vmatpush1.bf16.msra.mxu0 0
    %80 = vmatprep.subr.bf16.mxu0 0
    %81 = vmatpush1.bf16.msra.mxu0 0
    %82 = vmatprep.subr.bf16.mxu0 0
    %83 = vmatpush1.bf16.msra.mxu0 %v62
    %84 = vmatprep.subr.bf16.mxu0 0
    %85 = vmatpush2.bf16.msra.mxu0 0
    %86 = vmatprep.subr.bf16.mxu0 0
    %87 = vmatpush2.bf16.msra.mxu0 0
    %88 = vmatprep.subr.bf16.mxu0 0
    %89 = vmatpush2.bf16.msra.mxu0 0
    %90 = vmatprep.subr.bf16.mxu0 0
    %91 = vmatpush2.bf16.msra.mxu0 0
    %92 = vmatprep.subr.bf16.mxu0 0
    %93 = vmatpush2.bf16.msra.mxu0 0
    %94 = vmatprep.subr.bf16.mxu0 0
    %95 = vmatpush2.bf16.msra.mxu0 0
    %96 = vmatprep.subr.bf16.mxu0 0
    %97 = vmatpush2.bf16.msra.mxu0 0
    %98 = vmatprep.subr.bf16.mxu0 0
    %99 = vmatpush2.bf16.msra.mxu0 0
    %100 = vmatprep.mubr.bf16.mxu0 0
    %101 = vmatmul.mubr.bf16.gmra.mxu0 %v66
    %v102 = vpop.f32.mrf.mxu0
    %v103 = vadd.f32 %v52, %v102
    %v104 = vpop.f32.mrf.mxu0
    %v105 = vpop.f32.mrf.mxu0
    %v106 = vadd.f32 %v52, %v105
    %v107 = vpop.f32.mrf.mxu0
    %108 = vdwg.mxu0
    %v109 = vld [vmem:[%s1] sm:$0xf]
    %v110 = vld [vmem:[%s1 + $0x4] sm:$0xf]
    %v111 = vld [vmem:[%s1 + $0x8] sm:$0xf]
    %v112 = vld [vmem:[%s1 + $0xc] sm:$0xf]
    %v113 = vld [vmem:[%s1 + $0x10] sm:$0xf]
    %v114 = vld [vmem:[%s1 + $0x14] sm:$0xf]
    %v115 = vld [vmem:[%s1 + $0x18] sm:$0xf]
    %v116 = vld [vmem:[%s1 + $0x1c] sm:$0xf]
    %v117 = vld [vmem:[%s1 + $0x20] sm:$0xf]
    %v118 = vld [vmem:[%s1 + $0x24] sm:$0xf]
    %v119 = vld [vmem:[%s1 + $0x28] sm:$0xf]
    %v120 = vld [vmem:[%s1 + $0x2c] sm:$0xf]
    %v121 = vld [vmem:[%s1 + $0x30] sm:$0xf]
    %v122 = vld [vmem:[%s1 + $0x34] sm:$0xf]
    %v123 = vld [vmem:[%s1 + $0x38] sm:$0xf]
    %v124 = vld [vmem:[%s1 + $0x3c] sm:$0xf]
    %s125 = scalar_lea.vmem %s3, 8
    %v126 = vld [vmem:[%s125] sm:$0xf]
    %v127 = vld [vmem:[%s125 + $0x4] sm:$0xf]
    %v128 = vld [vmem:[%s5 + $0x1] sm:$0x1]
    %v129 = vlaneseq
    %v130 = vshrl.u32 %v129, 7
    %v131 = vsub.s32 0, %v130
    %v132 = vrot.slane %v128, %v131
    %v149 = vunpack.c.l.b16 %v109
    %v150 = vunpack.c.l.b16 %v110
    %v151 = vunpack.c.l.b16 %v111
    %v152 = vunpack.c.l.b16 %v112
    %v153 = vunpack.c.l.b16 %v113
    %v154 = vunpack.c.l.b16 %v114
    %v155 = vunpack.c.l.b16 %v115
    %v156 = vunpack.c.l.b16 %v116
    %v157 = vunpack.c.l.b16 %v117
    %v158 = vunpack.c.l.b16 %v118
    %v159 = vunpack.c.l.b16 %v119
    %v160 = vunpack.c.l.b16 %v120
    %v161 = vunpack.c.l.b16 %v121
    %v162 = vunpack.c.l.b16 %v122
    %v163 = vunpack.c.l.b16 %v123
    %v164 = vunpack.c.l.b16 %v124
    %v165 = vpack.c.b16 %v150, %v149
    %v166 = vpack.c.b16 %v152, %v151
    %v167 = vpack.c.b16 %v154, %v153
    %v168 = vpack.c.b16 %v156, %v155
    %v169 = vpack.c.b16 %v158, %v157
    %v170 = vpack.c.b16 %v160, %v159
    %v171 = vpack.c.b16 %v162, %v161
    %v172 = vpack.c.b16 %v164, %v163
    %v175 = vunpack.c.l.b16 %v126
    %v176 = vunpack.c.l.b16 %v127
    %v177 = vpack.c.b16 %v176, %v175
    %v180 = vsel %vm64, %v165, 0
    %v183 = vsel %vm64, %v166, 0
    %v186 = vsel %vm64, %v167, 0
    %v189 = vsel %vm64, %v168, 0
    %v192 = vsel %vm64, %v169, 0
    %v195 = vsel %vm64, %v170, 0
    %v198 = vsel %vm64, %v171, 0
    %v201 = vsel %vm64, %v172, 0
    %203 = vmatprep.subr.bf16.mxu0 0
    %204 = vmatpush1.bf16.msra.mxu0 0
    %205 = vmatprep.subr.bf16.mxu0 0
    %206 = vmatpush1.bf16.msra.mxu0 0
    %207 = vmatprep.subr.bf16.mxu0 0
    %208 = vmatpush1.bf16.msra.mxu0 0
    %209 = vmatprep.subr.bf16.mxu0 0
    %210 = vmatpush1.bf16.msra.mxu0 0
    %211 = vmatprep.subr.bf16.mxu0 0
    %212 = vmatpush1.bf16.msra.mxu0 0
    %213 = vmatprep.subr.bf16.mxu0 0
    %214 = vmatpush1.bf16.msra.mxu0 0
    %215 = vmatprep.subr.bf16.mxu0 0
    %216 = vmatpush1.bf16.msra.mxu0 0
    %217 = vmatprep.subr.bf16.mxu0 0
    %218 = vmatpush1.bf16.msra.mxu0 %v177
    %219 = vmatprep.subr.bf16.mxu0 0
    %220 = vmatpush2.bf16.msra.mxu0 0
    %221 = vmatprep.subr.bf16.mxu0 0
    %222 = vmatpush2.bf16.msra.mxu0 0
    %223 = vmatprep.subr.bf16.mxu0 0
    %224 = vmatpush2.bf16.msra.mxu0 0
    %225 = vmatprep.subr.bf16.mxu0 0
    %226 = vmatpush2.bf16.msra.mxu0 0
    %227 = vmatprep.subr.bf16.mxu0 0
    %228 = vmatpush2.bf16.msra.mxu0 0
    %229 = vmatprep.subr.bf16.mxu0 0
    %230 = vmatpush2.bf16.msra.mxu0 0
    %231 = vmatprep.subr.bf16.mxu0 0
    %232 = vmatpush2.bf16.msra.mxu0 0
    %233 = vmatprep.subr.bf16.mxu0 0
    %234 = vmatpush2.bf16.msra.mxu0 0
    %235 = vmatprep.mubr.bf16.mxu0 0
    %236 = vmatmul.mubr.bf16.gmra.mxu0 %v180
    %v237 = vpop.f32.mrf.mxu0
    %v238 = vadd.f32 %v132, %v237
    %v239 = vpop.f32.mrf.mxu0
    %v240 = vpop.f32.mrf.mxu0
    %v241 = vadd.f32 %v132, %v240
    %v242 = vpop.f32.mrf.mxu0
    %243 = vmatprep.mubr.bf16.mxu0 0
    %244 = vmatmul.mubr.bf16.gmra.mxu0 %v183
    %v245 = vpop.f32.mrf.mxu0
    %v246 = vadd.f32 %v132, %v245
    %v247 = vpop.f32.mrf.mxu0
    %v248 = vpop.f32.mrf.mxu0
    %v249 = vadd.f32 %v132, %v248
    %v250 = vpop.f32.mrf.mxu0
    %251 = vmatprep.mubr.bf16.mxu0 0
    %252 = vmatmul.mubr.bf16.gmra.mxu0 %v186
    %v253 = vpop.f32.mrf.mxu0
    %v254 = vadd.f32 %v132, %v253
    %v255 = vpop.f32.mrf.mxu0
    %v256 = vpop.f32.mrf.mxu0
    %v257 = vadd.f32 %v132, %v256
    %v258 = vpop.f32.mrf.mxu0
    %259 = vmatprep.mubr.bf16.mxu0 0
    %260 = vmatmul.mubr.bf16.gmra.mxu0 %v189
    %v261 = vpop.f32.mrf.mxu0
    %v262 = vadd.f32 %v132, %v261
    %v263 = vpop.f32.mrf.mxu0
    %v264 = vpop.f32.mrf.mxu0
    %v265 = vadd.f32 %v132, %v264
    %v266 = vpop.f32.mrf.mxu0
    %267 = vmatprep.mubr.bf16.mxu0 0
    %268 = vmatmul.mubr.bf16.gmra.mxu0 %v192
    %v269 = vpop.f32.mrf.mxu0
    %v270 = vadd.f32 %v132, %v269
    %v271 = vpop.f32.mrf.mxu0
    %v272 = vpop.f32.mrf.mxu0
    %v273 = vadd.f32 %v132, %v272
    %v274 = vpop.f32.mrf.mxu0
    %275 = vmatprep.mubr.bf16.mxu0 0
    %276 = vmatmul.mubr.bf16.gmra.mxu0 %v195
    %v277 = vpop.f32.mrf.mxu0
    %v278 = vadd.f32 %v132, %v277
    %v279 = vpop.f32.mrf.mxu0
    %v280 = vpop.f32.mrf.mxu0
    %v281 = vadd.f32 %v132, %v280
    %v282 = vpop.f32.mrf.mxu0
    %283 = vmatprep.mubr.bf16.mxu0 0
    %284 = vmatmul.mubr.bf16.gmra.mxu0 %v198
    %v285 = vpop.f32.mrf.mxu0
    %v286 = vadd.f32 %v132, %v285
    %v287 = vpop.f32.mrf.mxu0
    %v288 = vpop.f32.mrf.mxu0
    %v289 = vadd.f32 %v132, %v288
    %v290 = vpop.f32.mrf.mxu0
    %291 = vmatprep.mubr.bf16.mxu0 0
    %292 = vmatmul.mubr.bf16.gmra.mxu0 %v201
    %v293 = vpop.f32.mrf.mxu0
    %v294 = vadd.f32 %v132, %v293
    %v295 = vpop.f32.mrf.mxu0
    %v296 = vpop.f32.mrf.mxu0
    %v297 = vadd.f32 %v132, %v296
    %v298 = vpop.f32.mrf.mxu0
    %299 = vdwg.mxu0
    %v300 = vld [vmem:[#allocation2] sm:$0xf]
    %v301 = vld [vmem:[#allocation2 + $0x4] sm:$0xf]
    %v302 = vld [vmem:[#allocation2 + $0x8] sm:$0xf]
    %v303 = vld [vmem:[#allocation2 + $0xc] sm:$0xf]
    %v304 = vld [vmem:[#allocation2 + $0x10] sm:$0xf]
    %v305 = vld [vmem:[#allocation2 + $0x14] sm:$0xf]
    %v306 = vld [vmem:[#allocation2 + $0x18] sm:$0xf]
    %v307 = vld [vmem:[#allocation2 + $0x1c] sm:$0xf]
    %v308 = vld [vmem:[#allocation2 + $0x20] sm:$0xf]
    %v309 = vld [vmem:[#allocation2 + $0x24] sm:$0xf]
    %v310 = vld [vmem:[#allocation2 + $0x28] sm:$0xf]
    %v311 = vld [vmem:[#allocation2 + $0x2c] sm:$0xf]
    %v312 = vld [vmem:[#allocation2 + $0x30] sm:$0xf]
    %v313 = vld [vmem:[#allocation2 + $0x34] sm:$0xf]
    %v314 = vld [vmem:[#allocation2 + $0x38] sm:$0xf]
    %v315 = vld [vmem:[#allocation2 + $0x3c] sm:$0xf]
    %s316 = scalar_lea.vmem [#allocation2], 64
    %v317 = vld [vmem:[%s316] sm:$0xf]
    %v318 = vld [vmem:[%s316 + $0x4] sm:$0xf]
    %v319 = vld [vmem:[%s316 + $0x8] sm:$0xf]
    %v320 = vld [vmem:[%s316 + $0xc] sm:$0xf]
    %v321 = vld [vmem:[%s316 + $0x10] sm:$0xf]
    %v322 = vld [vmem:[%s316 + $0x14] sm:$0xf]
    %v323 = vld [vmem:[%s316 + $0x18] sm:$0xf]
    %v324 = vld [vmem:[%s316 + $0x1c] sm:$0xf]
    %v325 = vld [vmem:[%s316 + $0x20] sm:$0xf]
    %v326 = vld [vmem:[%s316 + $0x24] sm:$0xf]
    %v327 = vld [vmem:[%s316 + $0x28] sm:$0xf]
    %v328 = vld [vmem:[%s316 + $0x2c] sm:$0xf]
    %v329 = vld [vmem:[%s316 + $0x30] sm:$0xf]
    %v330 = vld [vmem:[%s316 + $0x34] sm:$0xf]
    %v331 = vld [vmem:[%s316 + $0x38] sm:$0xf]
    %v332 = vld [vmem:[%s316 + $0x3c] sm:$0xf]
    %s333 = scalar_lea.vmem [#allocation2], 128
    %v334 = vld [vmem:[%s333] sm:$0xf]
    %v335 = vld [vmem:[%s333 + $0x4] sm:$0xf]
    %v336 = vld [vmem:[%s333 + $0x8] sm:$0xf]
    %v337 = vld [vmem:[%s333 + $0xc] sm:$0xf]
    %v338 = vld [vmem:[%s333 + $0x10] sm:$0xf]
    %v339 = vld [vmem:[%s333 + $0x14] sm:$0xf]
    %v340 = vld [vmem:[%s333 + $0x18] sm:$0xf]
    %v341 = vld [vmem:[%s333 + $0x1c] sm:$0xf]
    %v342 = vld [vmem:[%s333 + $0x20] sm:$0xf]
    %v343 = vld [vmem:[%s333 + $0x24] sm:$0xf]
    %v344 = vld [vmem:[%s333 + $0x28] sm:$0xf]
    %v345 = vld [vmem:[%s333 + $0x2c] sm:$0xf]
    %v346 = vld [vmem:[%s333 + $0x30] sm:$0xf]
    %v347 = vld [vmem:[%s333 + $0x34] sm:$0xf]
    %v348 = vld [vmem:[%s333 + $0x38] sm:$0xf]
    %v349 = vld [vmem:[%s333 + $0x3c] sm:$0xf]
    %v350 = vpack.c.bf16 %v106, %v103
    %v351 = vld [vmem:[%s5 + $0x2] sm:$0x1]
    %v352 = vlaneseq
    %v353 = vshrl.u32 %v352, 7
    %v354 = vsub.s32 0, %v353
    %v355 = vrot.slane %v351, %v354
    %v372 = vunpack.c.l.b16 %v300
    %v373 = vunpack.c.l.b16 %v301
    %v374 = vunpack.c.l.b16 %v302
    %v375 = vunpack.c.l.b16 %v303
    %v376 = vunpack.c.l.b16 %v304
    %v377 = vunpack.c.l.b16 %v305
    %v378 = vunpack.c.l.b16 %v306
    %v379 = vunpack.c.l.b16 %v307
    %v380 = vunpack.c.l.b16 %v308
    %v381 = vunpack.c.l.b16 %v309
    %v382 = vunpack.c.l.b16 %v310
    %v383 = vunpack.c.l.b16 %v311
    %v384 = vunpack.c.l.b16 %v312
    %v385 = vunpack.c.l.b16 %v313
    %v386 = vunpack.c.l.b16 %v314
    %v387 = vunpack.c.l.b16 %v315
    %v388 = vpack.c.b16 %v373, %v372
    %v389 = vpack.c.b16 %v375, %v374
    %v390 = vpack.c.b16 %v377, %v376
    %v391 = vpack.c.b16 %v379, %v378
    %v392 = vpack.c.b16 %v381, %v380
    %v393 = vpack.c.b16 %v383, %v382
    %v394 = vpack.c.b16 %v385, %v384
    %v395 = vpack.c.b16 %v387, %v386
    %404 = vmatprep.subr.bf16.mxu0 0
    %405 = vmatpush1.bf16.msra.mxu0 %v395
    %406 = vmatprep.subr.bf16.mxu0 0
    %407 = vmatpush1.bf16.msra.mxu0 %v394
    %408 = vmatprep.subr.bf16.mxu0 0
    %409 = vmatpush1.bf16.msra.mxu0 %v393
    %410 = vmatprep.subr.bf16.mxu0 0
    %411 = vmatpush1.bf16.msra.mxu0 %v392
    %412 = vmatprep.subr.bf16.mxu0 0
    %413 = vmatpush1.bf16.msra.mxu0 %v391
    %414 = vmatprep.subr.bf16.mxu0 0
    %415 = vmatpush1.bf16.msra.mxu0 %v390
    %416 = vmatprep.subr.bf16.mxu0 0
    %417 = vmatpush1.bf16.msra.mxu0 %v389
    %418 = vmatprep.subr.bf16.mxu0 0
    %419 = vmatpush1.bf16.msra.mxu0 %v388
    %420 = vmatprep.subr.bf16.mxu0 0
    %421 = vmatpush2.bf16.msra.mxu0 0
    %422 = vmatprep.subr.bf16.mxu0 0
    %423 = vmatpush2.bf16.msra.mxu0 0
    %424 = vmatprep.subr.bf16.mxu0 0
    %425 = vmatpush2.bf16.msra.mxu0 0
    %426 = vmatprep.subr.bf16.mxu0 0
    %427 = vmatpush2.bf16.msra.mxu0 0
    %428 = vmatprep.subr.bf16.mxu0 0
    %429 = vmatpush2.bf16.msra.mxu0 0
    %430 = vmatprep.subr.bf16.mxu0 0
    %431 = vmatpush2.bf16.msra.mxu0 0
    %432 = vmatprep.subr.bf16.mxu0 0
    %433 = vmatpush2.bf16.msra.mxu0 0
    %434 = vmatprep.subr.bf16.mxu0 0
    %435 = vmatpush2.bf16.msra.mxu0 0
    %436 = vmatprep.mubr.bf16.mxu0 0
    %437 = vmatmul.mubr.bf16.gmra.mxu0 %v350
    %v438 = vpop.f32.mrf.mxu0
    %v439 = vadd.f32 %v355, %v438
    %v440 = vpop.f32.mrf.mxu0
    %v441 = vpop.f32.mrf.mxu0
    %v442 = vadd.f32 %v355, %v441
    %v443 = vpop.f32.mrf.mxu0
    %444 = vdwg.mxu0
    %v445 = vmul.f32 %v439, 0.5
    %v446 = vmul.f32 %v442, 0.5
    %v447 = vtanh.pop %v445
    %v448 = vtanh.pop %v446
    %v449 = vmul.f32 %v447, 0.5
    %v450 = vmul.f32 %v448, 0.5
    %v451 = vadd.f32 %v449, 0.5
    %v452 = vadd.f32 %v450, 0.5
    %v453 = vpack.c.bf16 %v452, %v451
    %v456 = vunpack.c.l.b16 %v42
    %v457 = vunpack.c.l.b16 %v43
    %v458 = vpack.c.b16 %v457, %v456
    %460 = vxpose.xlu0.c.b16.start [1/8] %v458, 128
    %461 = vxpose.xlu0.c.b16.cont [2/8] 0, 128
    %462 = vxpose.xlu0.c.b16.cont [3/8] 0, 128
    %463 = vxpose.xlu0.c.b16.cont [4/8] 0, 128
    %464 = vxpose.xlu0.c.b16.cont [5/8] 0, 128
    %465 = vxpose.xlu0.c.b16.cont [6/8] 0, 128
    %466 = vxpose.xlu0.c.b16.cont [7/8] 0, 128
    %467 = vxpose.xlu0.c.b16.end [8/8] 0, 128
    %v468 = vpop.trf.xlu0
    %v469 = vpop.trf.xlu0
    %v470 = vpop.trf.xlu0
    %v471 = vpop.trf.xlu0
    %v472 = vpop.trf.xlu0
    %v473 = vpop.trf.xlu0
    %v474 = vpop.trf.xlu0
    %v475 = vpop.trf.xlu0
    %v477 = vsel %vm64, %v468, 0
    %v480 = vsel %vm64, %v469, 0
    %v483 = vsel %vm64, %v470, 0
    %v486 = vsel %vm64, %v471, 0
    %v489 = vsel %vm64, %v472, 0
    %v492 = vsel %vm64, %v473, 0
    %v495 = vsel %vm64, %v474, 0
    %v498 = vsel %vm64, %v475, 0
    %500 = vmatprep.subr.bf16.mxu0 0
    %501 = vmatpush1.bf16.msra.mxu0 0
    %502 = vmatprep.subr.bf16.mxu0 0
    %503 = vmatpush1.bf16.msra.mxu0 0
    %504 = vmatprep.subr.bf16.mxu0 0
    %505 = vmatpush1.bf16.msra.mxu0 0
    %506 = vmatprep.subr.bf16.mxu0 0
    %507 = vmatpush1.bf16.msra.mxu0 0
    %508 = vmatprep.subr.bf16.mxu0 0
    %509 = vmatpush1.bf16.msra.mxu0 0
    %510 = vmatprep.subr.bf16.mxu0 0
    %511 = vmatpush1.bf16.msra.mxu0 0
    %512 = vmatprep.subr.bf16.mxu0 0
    %513 = vmatpush1.bf16.msra.mxu0 0
    %514 = vmatprep.subr.bf16.mxu0 0
    %515 = vmatpush1.bf16.msra.mxu0 %v453
    %516 = vmatprep.subr.bf16.mxu0 0
    %517 = vmatpush2.bf16.msra.mxu0 0
    %518 = vmatprep.subr.bf16.mxu0 0
    %519 = vmatpush2.bf16.msra.mxu0 0
    %520 = vmatprep.subr.bf16.mxu0 0
    %521 = vmatpush2.bf16.msra.mxu0 0
    %522 = vmatprep.subr.bf16.mxu0 0
    %523 = vmatpush2.bf16.msra.mxu0 0
    %524 = vmatprep.subr.bf16.mxu0 0
    %525 = vmatpush2.bf16.msra.mxu0 0
    %526 = vmatprep.subr.bf16.mxu0 0
    %527 = vmatpush2.bf16.msra.mxu0 0
    %528 = vmatprep.subr.bf16.mxu0 0
    %529 = vmatpush2.bf16.msra.mxu0 0
    %530 = vmatprep.subr.bf16.mxu0 0
    %531 = vmatpush2.bf16.msra.mxu0 0
    %532 = vmatprep.mubr.bf16.mxu0 0
    %533 = vmatmul.mubr.bf16.gmra.mxu0 %v477
    %v534 = vpop.f32.mrf.mxu0
    %v535 = vadd.f32 0.0, %v534
    %v536 = vpop.f32.mrf.mxu0
    %v537 = vpop.f32.mrf.mxu0
    %v538 = vadd.f32 0.0, %v537
    %v539 = vpop.f32.mrf.mxu0
    %540 = vmatprep.mubr.bf16.mxu0 0
    %541 = vmatmul.mubr.bf16.gmra.mxu0 %v480
    %v542 = vpop.f32.mrf.mxu0
    %v543 = vadd.f32 0.0, %v542
    %v544 = vpop.f32.mrf.mxu0
    %v545 = vpop.f32.mrf.mxu0
    %v546 = vadd.f32 0.0, %v545
    %v547 = vpop.f32.mrf.mxu0
    %548 = vmatprep.mubr.bf16.mxu0 0
    %549 = vmatmul.mubr.bf16.gmra.mxu0 %v483
    %v550 = vpop.f32.mrf.mxu0
    %v551 = vadd.f32 0.0, %v550
    %v552 = vpop.f32.mrf.mxu0
    %v553 = vpop.f32.mrf.mxu0
    %v554 = vadd.f32 0.0, %v553
    %v555 = vpop.f32.mrf.mxu0
    %556 = vmatprep.mubr.bf16.mxu0 0
    %557 = vmatmul.mubr.bf16.gmra.mxu0 %v486
    %v558 = vpop.f32.mrf.mxu0
    %v559 = vadd.f32 0.0, %v558
    %v560 = vpop.f32.mrf.mxu0
    %v561 = vpop.f32.mrf.mxu0
    %v562 = vadd.f32 0.0, %v561
    %v563 = vpop.f32.mrf.mxu0
    %564 = vmatprep.mubr.bf16.mxu0 0
    %565 = vmatmul.mubr.bf16.gmra.mxu0 %v489
    %v566 = vpop.f32.mrf.mxu0
    %v567 = vadd.f32 0.0, %v566
    %v568 = vpop.f32.mrf.mxu0
    %v569 = vpop.f32.mrf.mxu0
    %v570 = vadd.f32 0.0, %v569
    %v571 = vpop.f32.mrf.mxu0
    %572 = vmatprep.mubr.bf16.mxu0 0
    %573 = vmatmul.mubr.bf16.gmra.mxu0 %v492
    %v574 = vpop.f32.mrf.mxu0
    %v575 = vadd.f32 0.0, %v574
    %v576 = vpop.f32.mrf.mxu0
    %v577 = vpop.f32.mrf.mxu0
    %v578 = vadd.f32 0.0, %v577
    %v579 = vpop.f32.mrf.mxu0
    %580 = vmatprep.mubr.bf16.mxu0 0
    %581 = vmatmul.mubr.bf16.gmra.mxu0 %v495
    %v582 = vpop.f32.mrf.mxu0
    %v583 = vadd.f32 0.0, %v582
    %v584 = vpop.f32.mrf.mxu0
    %v585 = vpop.f32.mrf.mxu0
    %v586 = vadd.f32 0.0, %v585
    %v587 = vpop.f32.mrf.mxu0
    %588 = vmatprep.mubr.bf16.mxu0 0
    %589 = vmatmul.mubr.bf16.gmra.mxu0 %v498
    %v590 = vpop.f32.mrf.mxu0
    %v591 = vadd.f32 0.0, %v590
    %v592 = vpop.f32.mrf.mxu0
    %v593 = vpop.f32.mrf.mxu0
    %v594 = vadd.f32 0.0, %v593
    %v595 = vpop.f32.mrf.mxu0
    %596 = vdwg.mxu0
    %v597 = vpack.c.bf16 %v241, %v238
    %v598 = vpack.c.bf16 %v249, %v246
    %v599 = vpack.c.bf16 %v257, %v254
    %v600 = vpack.c.bf16 %v265, %v262
    %v601 = vpack.c.bf16 %v273, %v270
    %v602 = vpack.c.bf16 %v281, %v278
    %v603 = vpack.c.bf16 %v289, %v286
    %v604 = vpack.c.bf16 %v297, %v294
    %v605 = vpack.c.bf16 %v538, %v535
    %v606 = vpack.c.bf16 %v546, %v543
    %v607 = vpack.c.bf16 %v554, %v551
    %v608 = vpack.c.bf16 %v562, %v559
    %v609 = vpack.c.bf16 %v570, %v567
    %v610 = vpack.c.bf16 %v578, %v575
    %v611 = vpack.c.bf16 %v586, %v583
    %v612 = vpack.c.bf16 %v594, %v591
    %v629 = vunpack.c.l.b16 %v334
    %v630 = vunpack.c.l.b16 %v335
    %v631 = vunpack.c.l.b16 %v336
    %v632 = vunpack.c.l.b16 %v337
    %v633 = vunpack.c.l.b16 %v338
    %v634 = vunpack.c.l.b16 %v339
    %v635 = vunpack.c.l.b16 %v340
    %v636 = vunpack.c.l.b16 %v341
    %v637 = vunpack.c.l.b16 %v342
    %v638 = vunpack.c.l.b16 %v343
    %v639 = vunpack.c.l.b16 %v344
    %v640 = vunpack.c.l.b16 %v345
    %v641 = vunpack.c.l.b16 %v346
    %v642 = vunpack.c.l.b16 %v347
    %v643 = vunpack.c.l.b16 %v348
    %v644 = vunpack.c.l.b16 %v349
    %v645 = vpack.c.b16 %v630, %v629
    %v646 = vpack.c.b16 %v632, %v631
    %v647 = vpack.c.b16 %v634, %v633
    %v648 = vpack.c.b16 %v636, %v635
    %v649 = vpack.c.b16 %v638, %v637
    %v650 = vpack.c.b16 %v640, %v639
    %v651 = vpack.c.b16 %v642, %v641
    %v652 = vpack.c.b16 %v644, %v643
    %661 = vmatprep.subr.bf16.mxu0 0
    %662 = vmatpush1.bf16.msra.mxu0 %v652
    %663 = vmatprep.subr.bf16.mxu0 0
    %664 = vmatpush1.bf16.msra.mxu0 %v651
    %665 = vmatprep.subr.bf16.mxu0 0
    %666 = vmatpush1.bf16.msra.mxu0 %v650
    %667 = vmatprep.subr.bf16.mxu0 0
    %668 = vmatpush1.bf16.msra.mxu0 %v649
    %669 = vmatprep.subr.bf16.mxu0 0
    %670 = vmatpush1.bf16.msra.mxu0 %v648
    %671 = vmatprep.subr.bf16.mxu0 0
    %672 = vmatpush1.bf16.msra.mxu0 %v647
    %673 = vmatprep.subr.bf16.mxu0 0
    %674 = vmatpush1.bf16.msra.mxu0 %v646
    %675 = vmatprep.subr.bf16.mxu0 0
    %676 = vmatpush1.bf16.msra.mxu0 %v645
    %677 = vmatprep.subr.bf16.mxu0 0
    %678 = vmatpush2.bf16.msra.mxu0 0
    %679 = vmatprep.subr.bf16.mxu0 0
    %680 = vmatpush2.bf16.msra.mxu0 0
    %681 = vmatprep.subr.bf16.mxu0 0
    %682 = vmatpush2.bf16.msra.mxu0 0
    %683 = vmatprep.subr.bf16.mxu0 0
    %684 = vmatpush2.bf16.msra.mxu0 0
    %685 = vmatprep.subr.bf16.mxu0 0
    %686 = vmatpush2.bf16.msra.mxu0 0
    %687 = vmatprep.subr.bf16.mxu0 0
    %688 = vmatpush2.bf16.msra.mxu0 0
    %689 = vmatprep.subr.bf16.mxu0 0
    %690 = vmatpush2.bf16.msra.mxu0 0
    %691 = vmatprep.subr.bf16.mxu0 0
    %692 = vmatpush2.bf16.msra.mxu0 0
    %693 = vmatprep.mubr.bf16.mxu0 0
    %694 = vmatmul.mubr.bf16.gmra.mxu0 %v605
    %v695 = vpop.f32.mrf.mxu0
    %v696 = vadd.f32 0.0, %v695
    %v697 = vpop.f32.mrf.mxu0
    %v698 = vpop.f32.mrf.mxu0
    %v699 = vadd.f32 0.0, %v698
    %v700 = vpop.f32.mrf.mxu0
    %701 = vmatprep.mubr.bf16.mxu0 0
    %702 = vmatmul.mubr.bf16.gmra.mxu0 %v606
    %v703 = vpop.f32.mrf.mxu0
    %v704 = vadd.f32 0.0, %v703
    %v705 = vpop.f32.mrf.mxu0
    %v706 = vpop.f32.mrf.mxu0
    %v707 = vadd.f32 0.0, %v706
    %v708 = vpop.f32.mrf.mxu0
    %709 = vmatprep.mubr.bf16.mxu0 0
    %710 = vmatmul.mubr.bf16.gmra.mxu0 %v607
    %v711 = vpop.f32.mrf.mxu0
    %v712 = vadd.f32 0.0, %v711
    %v713 = vpop.f32.mrf.mxu0
    %v714 = vpop.f32.mrf.mxu0
    %v715 = vadd.f32 0.0, %v714
    %v716 = vpop.f32.mrf.mxu0
    %717 = vmatprep.mubr.bf16.mxu0 0
    %718 = vmatmul.mubr.bf16.gmra.mxu0 %v608
    %v719 = vpop.f32.mrf.mxu0
    %v720 = vadd.f32 0.0, %v719
    %v721 = vpop.f32.mrf.mxu0
    %v722 = vpop.f32.mrf.mxu0
    %v723 = vadd.f32 0.0, %v722
    %v724 = vpop.f32.mrf.mxu0
    %725 = vmatprep.mubr.bf16.mxu0 0
    %726 = vmatmul.mubr.bf16.gmra.mxu0 %v609
    %v727 = vpop.f32.mrf.mxu0
    %v728 = vadd.f32 0.0, %v727
    %v729 = vpop.f32.mrf.mxu0
    %v730 = vpop.f32.mrf.mxu0
    %v731 = vadd.f32 0.0, %v730
    %v732 = vpop.f32.mrf.mxu0
    %733 = vmatprep.mubr.bf16.mxu0 0
    %734 = vmatmul.mubr.bf16.gmra.mxu0 %v610
    %v735 = vpop.f32.mrf.mxu0
    %v736 = vadd.f32 0.0, %v735
    %v737 = vpop.f32.mrf.mxu0
    %v738 = vpop.f32.mrf.mxu0
    %v739 = vadd.f32 0.0, %v738
    %v740 = vpop.f32.mrf.mxu0
    %741 = vmatprep.mubr.bf16.mxu0 0
    %742 = vmatmul.mubr.bf16.gmra.mxu0 %v611
    %v743 = vpop.f32.mrf.mxu0
    %v744 = vadd.f32 0.0, %v743
    %v745 = vpop.f32.mrf.mxu0
    %v746 = vpop.f32.mrf.mxu0
    %v747 = vadd.f32 0.0, %v746
    %v748 = vpop.f32.mrf.mxu0
    %749 = vmatprep.mubr.bf16.mxu0 0
    %750 = vmatmul.mubr.bf16.gmra.mxu0 %v612
    %v751 = vpop.f32.mrf.mxu0
    %v752 = vadd.f32 0.0, %v751
    %v753 = vpop.f32.mrf.mxu0
    %v754 = vpop.f32.mrf.mxu0
    %v755 = vadd.f32 0.0, %v754
    %v756 = vpop.f32.mrf.mxu0
    %757 = vdwg.mxu0
    %v774 = vunpack.c.l.b16 %v317
    %v775 = vunpack.c.l.b16 %v318
    %v776 = vunpack.c.l.b16 %v319
    %v777 = vunpack.c.l.b16 %v320
    %v778 = vunpack.c.l.b16 %v321
    %v779 = vunpack.c.l.b16 %v322
    %v780 = vunpack.c.l.b16 %v323
    %v781 = vunpack.c.l.b16 %v324
    %v782 = vunpack.c.l.b16 %v325
    %v783 = vunpack.c.l.b16 %v326
    %v784 = vunpack.c.l.b16 %v327
    %v785 = vunpack.c.l.b16 %v328
    %v786 = vunpack.c.l.b16 %v329
    %v787 = vunpack.c.l.b16 %v330
    %v788 = vunpack.c.l.b16 %v331
    %v789 = vunpack.c.l.b16 %v332
    %v790 = vpack.c.b16 %v775, %v774
    %v791 = vpack.c.b16 %v777, %v776
    %v792 = vpack.c.b16 %v779, %v778
    %v793 = vpack.c.b16 %v781, %v780
    %v794 = vpack.c.b16 %v783, %v782
    %v795 = vpack.c.b16 %v785, %v784
    %v796 = vpack.c.b16 %v787, %v786
    %v797 = vpack.c.b16 %v789, %v788
    %806 = vmatprep.subr.bf16.mxu0 0
    %807 = vmatpush1.bf16.msra.mxu0 %v797
    %808 = vmatprep.subr.bf16.mxu0 0
    %809 = vmatpush1.bf16.msra.mxu0 %v796
    %810 = vmatprep.subr.bf16.mxu0 0
    %811 = vmatpush1.bf16.msra.mxu0 %v795
    %812 = vmatprep.subr.bf16.mxu0 0
    %813 = vmatpush1.bf16.msra.mxu0 %v794
    %814 = vmatprep.subr.bf16.mxu0 0
    %815 = vmatpush1.bf16.msra.mxu0 %v793
    %816 = vmatprep.subr.bf16.mxu0 0
    %817 = vmatpush1.bf16.msra.mxu0 %v792
    %818 = vmatprep.subr.bf16.mxu0 0
    %819 = vmatpush1.bf16.msra.mxu0 %v791
    %820 = vmatprep.subr.bf16.mxu0 0
    %821 = vmatpush1.bf16.msra.mxu0 %v790
    %822 = vmatprep.subr.bf16.mxu0 0
    %823 = vmatpush2.bf16.msra.mxu0 0
    %824 = vmatprep.subr.bf16.mxu0 0
    %825 = vmatpush2.bf16.msra.mxu0 0
    %826 = vmatprep.subr.bf16.mxu0 0
    %827 = vmatpush2.bf16.msra.mxu0 0
    %828 = vmatprep.subr.bf16.mxu0 0
    %829 = vmatpush2.bf16.msra.mxu0 0
    %830 = vmatprep.subr.bf16.mxu0 0
    %831 = vmatpush2.bf16.msra.mxu0 0
    %832 = vmatprep.subr.bf16.mxu0 0
    %833 = vmatpush2.bf16.msra.mxu0 0
    %834 = vmatprep.subr.bf16.mxu0 0
    %835 = vmatpush2.bf16.msra.mxu0 0
    %836 = vmatprep.subr.bf16.mxu0 0
    %837 = vmatpush2.bf16.msra.mxu0 0
    %838 = vmatprep.mubr.bf16.mxu0 0
    %839 = vmatmul.mubr.bf16.gmra.mxu0 %v597
    %v840 = vpop.f32.mrf.mxu0
    %v841 = vadd.f32 %v696, %v840
    %v842 = vpop.f32.mrf.mxu0
    %v843 = vpop.f32.mrf.mxu0
    %v844 = vadd.f32 %v699, %v843
    %v845 = vpop.f32.mrf.mxu0
    %846 = vmatprep.mubr.bf16.mxu0 0
    %847 = vmatmul.mubr.bf16.gmra.mxu0 %v598
    %v848 = vpop.f32.mrf.mxu0
    %v849 = vadd.f32 %v704, %v848
    %v850 = vpop.f32.mrf.mxu0
    %v851 = vpop.f32.mrf.mxu0
    %v852 = vadd.f32 %v707, %v851
    %v853 = vpop.f32.mrf.mxu0
    %854 = vmatprep.mubr.bf16.mxu0 0
    %855 = vmatmul.mubr.bf16.gmra.mxu0 %v599
    %v856 = vpop.f32.mrf.mxu0
    %v857 = vadd.f32 %v712, %v856
    %v858 = vpop.f32.mrf.mxu0
    %v859 = vpop.f32.mrf.mxu0
    %v860 = vadd.f32 %v715, %v859
    %v861 = vpop.f32.mrf.mxu0
    %862 = vmatprep.mubr.bf16.mxu0 0
    %863 = vmatmul.mubr.bf16.gmra.mxu0 %v600
    %v864 = vpop.f32.mrf.mxu0
    %v865 = vadd.f32 %v720, %v864
    %v866 = vpop.f32.mrf.mxu0
    %v867 = vpop.f32.mrf.mxu0
    %v868 = vadd.f32 %v723, %v867
    %v869 = vpop.f32.mrf.mxu0
    %870 = vmatprep.mubr.bf16.mxu0 0
    %871 = vmatmul.mubr.bf16.gmra.mxu0 %v601
    %v872 = vpop.f32.mrf.mxu0
    %v873 = vadd.f32 %v728, %v872
    %v874 = vpop.f32.mrf.mxu0
    %v875 = vpop.f32.mrf.mxu0
    %v876 = vadd.f32 %v731, %v875
    %v877 = vpop.f32.mrf.mxu0
    %878 = vmatprep.mubr.bf16.mxu0 0
    %879 = vmatmul.mubr.bf16.gmra.mxu0 %v602
    %v880 = vpop.f32.mrf.mxu0
    %v881 = vadd.f32 %v736, %v880
    %v882 = vpop.f32.mrf.mxu0
    %v883 = vpop.f32.mrf.mxu0
    %v884 = vadd.f32 %v739, %v883
    %v885 = vpop.f32.mrf.mxu0
    %886 = vmatprep.mubr.bf16.mxu0 0
    %887 = vmatmul.mubr.bf16.gmra.mxu0 %v603
    %v888 = vpop.f32.mrf.mxu0
    %v889 = vadd.f32 %v744, %v888
    %v890 = vpop.f32.mrf.mxu0
    %v891 = vpop.f32.mrf.mxu0
    %v892 = vadd.f32 %v747, %v891
    %v893 = vpop.f32.mrf.mxu0
    %894 = vmatprep.mubr.bf16.mxu0 0
    %895 = vmatmul.mubr.bf16.gmra.mxu0 %v604
    %v896 = vpop.f32.mrf.mxu0
    %v897 = vadd.f32 %v752, %v896
    %v898 = vpop.f32.mrf.mxu0
    %v899 = vpop.f32.mrf.mxu0
    %v900 = vadd.f32 %v755, %v899
    %v901 = vpop.f32.mrf.mxu0
    %902 = vdwg.mxu0
    %v903 = vld [vmem:[%s5 + $0x3] sm:$0x1]
    %v904 = vlaneseq
    %v905 = vshrl.u32 %v904, 7
    %v906 = vsub.s32 0, %v905
    %v907 = vrot.slane %v903, %v906
    %v908 = vadd.f32 %v841, %v907
    %v909 = vadd.f32 %v844, %v907
    %v910 = vadd.f32 %v849, %v907
    %v911 = vadd.f32 %v852, %v907
    %v912 = vadd.f32 %v857, %v907
    %v913 = vadd.f32 %v860, %v907
    %v914 = vadd.f32 %v865, %v907
    %v915 = vadd.f32 %v868, %v907
    %v916 = vadd.f32 %v873, %v907
    %v917 = vadd.f32 %v876, %v907
    %v918 = vadd.f32 %v881, %v907
    %v919 = vadd.f32 %v884, %v907
    %v920 = vadd.f32 %v889, %v907
    %v921 = vadd.f32 %v892, %v907
    %v922 = vadd.f32 %v897, %v907
    %v923 = vadd.f32 %v900, %v907
    %v924 = vmul.f32 %v908, 0.5
    %v925 = vmul.f32 %v909, 0.5
    %v926 = vmul.f32 %v910, 0.5
    %v927 = vmul.f32 %v911, 0.5
    %v928 = vmul.f32 %v912, 0.5
    %v929 = vmul.f32 %v913, 0.5
    %v930 = vmul.f32 %v914, 0.5
    %v931 = vmul.f32 %v915, 0.5
    %v932 = vmul.f32 %v916, 0.5
    %v933 = vmul.f32 %v917, 0.5
    %v934 = vmul.f32 %v918, 0.5
    %v935 = vmul.f32 %v919, 0.5
    %v936 = vmul.f32 %v920, 0.5
    %v937 = vmul.f32 %v921, 0.5
    %v938 = vmul.f32 %v922, 0.5
    %v939 = vmul.f32 %v923, 0.5
    %v940 = vtanh.pop %v924
    %v941 = vtanh.pop %v925
    %v942 = vtanh.pop %v926
    %v943 = vtanh.pop %v927
    %v944 = vtanh.pop %v928
    %v945 = vtanh.pop %v929
    %v946 = vtanh.pop %v930
    %v947 = vtanh.pop %v931
    %v948 = vtanh.pop %v932
    %v949 = vtanh.pop %v933
    %v950 = vtanh.pop %v934
    %v951 = vtanh.pop %v935
    %v952 = vtanh.pop %v936
    %v953 = vtanh.pop %v937
    %v954 = vtanh.pop %v938
    %v955 = vtanh.pop %v939
    %v956 = vmul.f32 %v940, 0.5
    %v957 = vmul.f32 %v941, 0.5
    %v958 = vmul.f32 %v942, 0.5
    %v959 = vmul.f32 %v943, 0.5
    %v960 = vmul.f32 %v944, 0.5
    %v961 = vmul.f32 %v945, 0.5
    %v962 = vmul.f32 %v946, 0.5
    %v963 = vmul.f32 %v947, 0.5
    %v964 = vmul.f32 %v948, 0.5
    %v965 = vmul.f32 %v949, 0.5
    %v966 = vmul.f32 %v950, 0.5
    %v967 = vmul.f32 %v951, 0.5
    %v968 = vmul.f32 %v952, 0.5
    %v969 = vmul.f32 %v953, 0.5
    %v970 = vmul.f32 %v954, 0.5
    %v971 = vmul.f32 %v955, 0.5
    %v972 = vadd.f32 %v956, 0.5
    %v973 = vadd.f32 %v957, 0.5
    %v974 = vadd.f32 %v958, 0.5
    %v975 = vadd.f32 %v959, 0.5
    %v976 = vadd.f32 %v960, 0.5
    %v977 = vadd.f32 %v961, 0.5
    %v978 = vadd.f32 %v962, 0.5
    %v979 = vadd.f32 %v963, 0.5
    %v980 = vadd.f32 %v964, 0.5
    %v981 = vadd.f32 %v965, 0.5
    %v982 = vadd.f32 %v966, 0.5
    %v983 = vadd.f32 %v967, 0.5
    %v984 = vadd.f32 %v968, 0.5
    %v985 = vadd.f32 %v969, 0.5
    %v986 = vadd.f32 %v970, 0.5
    %v987 = vadd.f32 %v971, 0.5
    %v988 = vpack.c.bf16 %v973, %v972
    %v989 = vpack.c.bf16 %v975, %v974
    %v990 = vpack.c.bf16 %v977, %v976
    %v991 = vpack.c.bf16 %v979, %v978
    %v992 = vpack.c.bf16 %v981, %v980
    %v993 = vpack.c.bf16 %v983, %v982
    %v994 = vpack.c.bf16 %v985, %v984
    %v995 = vpack.c.bf16 %v987, %v986
    %996 = vmatprep.subr.bf16.mxu0 0
    %997 = vmatpush1.bf16.msra.mxu0 %v995
    %998 = vmatprep.subr.bf16.mxu0 0
    %999 = vmatpush1.bf16.msra.mxu0 %v994
    %1000 = vmatprep.subr.bf16.mxu0 0
    %1001 = vmatpush1.bf16.msra.mxu0 %v993
    %1002 = vmatprep.subr.bf16.mxu0 0
    %1003 = vmatpush1.bf16.msra.mxu0 %v992
    %1004 = vmatprep.subr.bf16.mxu0 0
    %1005 = vmatpush1.bf16.msra.mxu0 %v991
    %1006 = vmatprep.subr.bf16.mxu0 0
    %1007 = vmatpush1.bf16.msra.mxu0 %v990
    %1008 = vmatprep.subr.bf16.mxu0 0
    %1009 = vmatpush1.bf16.msra.mxu0 %v989
    %1010 = vmatprep.subr.bf16.mxu0 0
    %1011 = vmatpush1.bf16.msra.mxu0 %v988
    %1012 = vmatprep.subr.bf16.mxu0 0
    %1013 = vmatpush2.bf16.msra.mxu0 0
    %1014 = vmatprep.subr.bf16.mxu0 0
    %1015 = vmatpush2.bf16.msra.mxu0 0
    %1016 = vmatprep.subr.bf16.mxu0 0
    %1017 = vmatpush2.bf16.msra.mxu0 0
    %1018 = vmatprep.subr.bf16.mxu0 0
    %1019 = vmatpush2.bf16.msra.mxu0 0
    %1020 = vmatprep.subr.bf16.mxu0 0
    %1021 = vmatpush2.bf16.msra.mxu0 0
    %1022 = vmatprep.subr.bf16.mxu0 0
    %1023 = vmatpush2.bf16.msra.mxu0 0
    %1024 = vmatprep.subr.bf16.mxu0 0
    %1025 = vmatpush2.bf16.msra.mxu0 0
    %1026 = vmatprep.subr.bf16.mxu0 0
    %1027 = vmatpush2.bf16.msra.mxu0 0
    %1028 = vmatprep.mubr.bf16.mxu0 0
    %1029 = vmatmul.mubr.bf16.gmra.mxu0 %v458
    %v1030 = vpop.f32.mrf.mxu0
    %v1031 = vadd.f32 0.0, %v1030
    %v1032 = vpop.f32.mrf.mxu0
    %v1033 = vpop.f32.mrf.mxu0
    %v1034 = vadd.f32 0.0, %v1033
    %v1035 = vpop.f32.mrf.mxu0
    %1036 = vdwg.mxu0
    %v1037 = vld [vmem:[%s5 + $0x4] sm:$0x1]
    %v1038 = vlaneseq
    %v1039 = vshrl.u32 %v1038, 7
    %v1040 = vsub.s32 0, %v1039
    %v1041 = vrot.slane %v1037, %v1040
    %v1042 = vmul.f32 %v103, %v1041
    %v1043 = vmul.f32 %v106, %v1041
    %v1044 = vld [vmem:[%s5 + $0x5] sm:$0x1]
    %v1045 = vlaneseq
    %v1046 = vshrl.u32 %v1045, 7
    %v1047 = vsub.s32 0, %v1046
    %v1048 = vrot.slane %v1044, %v1047
    %v1049 = vadd.f32 %v1042, %v1048
    %v1050 = vadd.f32 %v1043, %v1048
    %v1051 = vadd.f32 %v1049, %v1031
    %v1052 = vadd.f32 %v1050, %v1034
    %v1053 = vmul.f32 %v1051, 0.5
    %v1054 = vmul.f32 %v1052, 0.5
    %v1055 = vtanh.pop %v1053
    %v1056 = vtanh.pop %v1054
    %v1057 = vmul.f32 %v1055, 0.5
    %v1058 = vmul.f32 %v1056, 0.5
    %v1059 = vadd.f32 %v1057, 0.5
    %v1060 = vadd.f32 %v1058, 0.5
    %v1061 = vld [vmem:[%s5 + $0x6] sm:$0x1]
    %v1062 = vlaneseq
    %v1063 = vshrl.u32 %v1062, 7
    %v1064 = vsub.s32 0, %v1063
    %v1065 = vrot.slane %v1061, %v1064
    %v1066 = vmul.f32 %v238, %v1065
    %v1067 = vmul.f32 %v241, %v1065
    %v1068 = vmul.f32 %v246, %v1065
    %v1069 = vmul.f32 %v249, %v1065
    %v1070 = vmul.f32 %v254, %v1065
    %v1071 = vmul.f32 %v257, %v1065
    %v1072 = vmul.f32 %v262, %v1065
    %v1073 = vmul.f32 %v265, %v1065
    %v1074 = vmul.f32 %v270, %v1065
    %v1075 = vmul.f32 %v273, %v1065
    %v1076 = vmul.f32 %v278, %v1065
    %v1077 = vmul.f32 %v281, %v1065
    %v1078 = vmul.f32 %v286, %v1065
    %v1079 = vmul.f32 %v289, %v1065
    %v1080 = vmul.f32 %v294, %v1065
    %v1081 = vmul.f32 %v297, %v1065
    %v1082 = vld [vmem:[%s5 + $0x7] sm:$0x1]
    %v1083 = vlaneseq
    %v1084 = vshrl.u32 %v1083, 7
    %v1085 = vsub.s32 0, %v1084
    %v1086 = vrot.slane %v1082, %v1085
    %v1087 = vadd.f32 %v1066, %v1086
    %v1088 = vadd.f32 %v1067, %v1086
    %v1089 = vadd.f32 %v1068, %v1086
    %v1090 = vadd.f32 %v1069, %v1086
    %v1091 = vadd.f32 %v1070, %v1086
    %v1092 = vadd.f32 %v1071, %v1086
    %v1093 = vadd.f32 %v1072, %v1086
    %v1094 = vadd.f32 %v1073, %v1086
    %v1095 = vadd.f32 %v1074, %v1086
    %v1096 = vadd.f32 %v1075, %v1086
    %v1097 = vadd.f32 %v1076, %v1086
    %v1098 = vadd.f32 %v1077, %v1086
    %v1099 = vadd.f32 %v1078, %v1086
    %v1100 = vadd.f32 %v1079, %v1086
    %v1101 = vadd.f32 %v1080, %v1086
    %v1102 = vadd.f32 %v1081, %v1086
    %v1103 = vadd.f32 %v1087, %v535
    %v1104 = vadd.f32 %v1088, %v538
    %v1105 = vadd.f32 %v1089, %v543
    %v1106 = vadd.f32 %v1090, %v546
    %v1107 = vadd.f32 %v1091, %v551
    %v1108 = vadd.f32 %v1092, %v554
    %v1109 = vadd.f32 %v1093, %v559
    %v1110 = vadd.f32 %v1094, %v562
    %v1111 = vadd.f32 %v1095, %v567
    %v1112 = vadd.f32 %v1096, %v570
    %v1113 = vadd.f32 %v1097, %v575
    %v1114 = vadd.f32 %v1098, %v578
    %v1115 = vadd.f32 %v1099, %v583
    %v1116 = vadd.f32 %v1100, %v586
    %v1117 = vadd.f32 %v1101, %v591
    %v1118 = vadd.f32 %v1102, %v594
    %v1119 = vmul.f32 %v1103, 0.5
    %v1120 = vmul.f32 %v1104, 0.5
    %v1121 = vmul.f32 %v1105, 0.5
    %v1122 = vmul.f32 %v1106, 0.5
    %v1123 = vmul.f32 %v1107, 0.5
    %v1124 = vmul.f32 %v1108, 0.5
    %v1125 = vmul.f32 %v1109, 0.5
    %v1126 = vmul.f32 %v1110, 0.5
    %v1127 = vmul.f32 %v1111, 0.5
    %v1128 = vmul.f32 %v1112, 0.5
    %v1129 = vmul.f32 %v1113, 0.5
    %v1130 = vmul.f32 %v1114, 0.5
    %v1131 = vmul.f32 %v1115, 0.5
    %v1132 = vmul.f32 %v1116, 0.5
    %v1133 = vmul.f32 %v1117, 0.5
    %v1134 = vmul.f32 %v1118, 0.5
    %v1135 = vtanh.pop %v1119
    %v1136 = vtanh.pop %v1120
    %v1137 = vtanh.pop %v1121
    %v1138 = vtanh.pop %v1122
    %v1139 = vtanh.pop %v1123
    %v1140 = vtanh.pop %v1124
    %v1141 = vtanh.pop %v1125
    %v1142 = vtanh.pop %v1126
    %v1143 = vtanh.pop %v1127
    %v1144 = vtanh.pop %v1128
    %v1145 = vtanh.pop %v1129
    %v1146 = vtanh.pop %v1130
    %v1147 = vtanh.pop %v1131
    %v1148 = vtanh.pop %v1132
    %v1149 = vtanh.pop %v1133
    %v1150 = vtanh.pop %v1134
    %v1151 = vmul.f32 %v1135, 0.5
    %v1152 = vmul.f32 %v1136, 0.5
    %v1153 = vmul.f32 %v1137, 0.5
    %v1154 = vmul.f32 %v1138, 0.5
    %v1155 = vmul.f32 %v1139, 0.5
    %v1156 = vmul.f32 %v1140, 0.5
    %v1157 = vmul.f32 %v1141, 0.5
    %v1158 = vmul.f32 %v1142, 0.5
    %v1159 = vmul.f32 %v1143, 0.5
    %v1160 = vmul.f32 %v1144, 0.5
    %v1161 = vmul.f32 %v1145, 0.5
    %v1162 = vmul.f32 %v1146, 0.5
    %v1163 = vmul.f32 %v1147, 0.5
    %v1164 = vmul.f32 %v1148, 0.5
    %v1165 = vmul.f32 %v1149, 0.5
    %v1166 = vmul.f32 %v1150, 0.5
    %v1167 = vadd.f32 %v1151, 0.5
    %v1168 = vadd.f32 %v1152, 0.5
    %v1169 = vadd.f32 %v1153, 0.5
    %v1170 = vadd.f32 %v1154, 0.5
    %v1171 = vadd.f32 %v1155, 0.5
    %v1172 = vadd.f32 %v1156, 0.5
    %v1173 = vadd.f32 %v1157, 0.5
    %v1174 = vadd.f32 %v1158, 0.5
    %v1175 = vadd.f32 %v1159, 0.5
    %v1176 = vadd.f32 %v1160, 0.5
    %v1177 = vadd.f32 %v1161, 0.5
    %v1178 = vadd.f32 %v1162, 0.5
    %v1179 = vadd.f32 %v1163, 0.5
    %v1180 = vadd.f32 %v1164, 0.5
    %v1181 = vadd.f32 %v1165, 0.5
    %v1182 = vadd.f32 %v1166, 0.5
    %s1183 = scalar_lea.vmem [#allocation2], 192
    %v1184 = vld [vmem:[%s1183] sm:$0xf]
    %v1185 = vld [vmem:[%s1183 + $0x4] sm:$0xf]
    %v1186 = vld [vmem:[%s1183 + $0x8] sm:$0xf]
    %v1187 = vld [vmem:[%s1183 + $0xc] sm:$0xf]
    %v1188 = vld [vmem:[%s1183 + $0x10] sm:$0xf]
    %v1189 = vld [vmem:[%s1183 + $0x14] sm:$0xf]
    %v1190 = vld [vmem:[%s1183 + $0x18] sm:$0xf]
    %v1191 = vld [vmem:[%s1183 + $0x1c] sm:$0xf]
    %v1192 = vld [vmem:[%s1183 + $0x20] sm:$0xf]
    %v1193 = vld [vmem:[%s1183 + $0x24] sm:$0xf]
    %v1194 = vld [vmem:[%s1183 + $0x28] sm:$0xf]
    %v1195 = vld [vmem:[%s1183 + $0x2c] sm:$0xf]
    %v1196 = vld [vmem:[%s1183 + $0x30] sm:$0xf]
    %v1197 = vld [vmem:[%s1183 + $0x34] sm:$0xf]
    %v1198 = vld [vmem:[%s1183 + $0x38] sm:$0xf]
    %v1199 = vld [vmem:[%s1183 + $0x3c] sm:$0xf]
    %s1200 = scalar_lea.vmem [#allocation2], 256
    %v1201 = vld [vmem:[%s1200] sm:$0xf]
    %v1202 = vld [vmem:[%s1200 + $0x4] sm:$0xf]
    %v1203 = vld [vmem:[%s1200 + $0x8] sm:$0xf]
    %v1204 = vld [vmem:[%s1200 + $0xc] sm:$0xf]
    %v1205 = vld [vmem:[%s1200 + $0x10] sm:$0xf]
    %v1206 = vld [vmem:[%s1200 + $0x14] sm:$0xf]
    %v1207 = vld [vmem:[%s1200 + $0x18] sm:$0xf]
    %v1208 = vld [vmem:[%s1200 + $0x1c] sm:$0xf]
    %v1209 = vld [vmem:[%s1200 + $0x20] sm:$0xf]
    %v1210 = vld [vmem:[%s1200 + $0x24] sm:$0xf]
    %v1211 = vld [vmem:[%s1200 + $0x28] sm:$0xf]
    %v1212 = vld [vmem:[%s1200 + $0x2c] sm:$0xf]
    %v1213 = vld [vmem:[%s1200 + $0x30] sm:$0xf]
    %v1214 = vld [vmem:[%s1200 + $0x34] sm:$0xf]
    %v1215 = vld [vmem:[%s1200 + $0x38] sm:$0xf]
    %v1216 = vld [vmem:[%s1200 + $0x3c] sm:$0xf]
    %s1217 = scalar_lea.vmem [#allocation2], 320
    %v1218 = vld [vmem:[%s1217] sm:$0xf]
    %v1219 = vld [vmem:[%s1217 + $0x4] sm:$0xf]
    %v1220 = vld [vmem:[%s1217 + $0x8] sm:$0xf]
    %v1221 = vld [vmem:[%s1217 + $0xc] sm:$0xf]
    %v1222 = vld [vmem:[%s1217 + $0x10] sm:$0xf]
    %v1223 = vld [vmem:[%s1217 + $0x14] sm:$0xf]
    %v1224 = vld [vmem:[%s1217 + $0x18] sm:$0xf]
    %v1225 = vld [vmem:[%s1217 + $0x1c] sm:$0xf]
    %v1226 = vld [vmem:[%s1217 + $0x20] sm:$0xf]
    %v1227 = vld [vmem:[%s1217 + $0x24] sm:$0xf]
    %v1228 = vld [vmem:[%s1217 + $0x28] sm:$0xf]
    %v1229 = vld [vmem:[%s1217 + $0x2c] sm:$0xf]
    %v1230 = vld [vmem:[%s1217 + $0x30] sm:$0xf]
    %v1231 = vld [vmem:[%s1217 + $0x34] sm:$0xf]
    %v1232 = vld [vmem:[%s1217 + $0x38] sm:$0xf]
    %v1233 = vld [vmem:[%s1217 + $0x3c] sm:$0xf]
    %v1234 = vpack.c.bf16 %v1060, %v1059
    %v1235 = vld [vmem:[%s5 + $0x8] sm:$0x1]
    %v1236 = vlaneseq
    %v1237 = vshrl.u32 %v1236, 7
    %v1238 = vsub.s32 0, %v1237
    %v1239 = vrot.slane %v1235, %v1238
    %v1256 = vunpack.c.l.b16 %v1184
    %v1257 = vunpack.c.l.b16 %v1185
    %v1258 = vunpack.c.l.b16 %v1186
    %v1259 = vunpack.c.l.b16 %v1187
    %v1260 = vunpack.c.l.b16 %v1188
    %v1261 = vunpack.c.l.b16 %v1189
    %v1262 = vunpack.c.l.b16 %v1190
    %v1263 = vunpack.c.l.b16 %v1191
    %v1264 = vunpack.c.l.b16 %v1192
    %v1265 = vunpack.c.l.b16 %v1193
    %v1266 = vunpack.c.l.b16 %v1194
    %v1267 = vunpack.c.l.b16 %v1195
    %v1268 = vunpack.c.l.b16 %v1196
    %v1269 = vunpack.c.l.b16 %v1197
    %v1270 = vunpack.c.l.b16 %v1198
    %v1271 = vunpack.c.l.b16 %v1199
    %v1272 = vpack.c.b16 %v1257, %v1256
    %v1273 = vpack.c.b16 %v1259, %v1258
    %v1274 = vpack.c.b16 %v1261, %v1260
    %v1275 = vpack.c.b16 %v1263, %v1262
    %v1276 = vpack.c.b16 %v1265, %v1264
    %v1277 = vpack.c.b16 %v1267, %v1266
    %v1278 = vpack.c.b16 %v1269, %v1268
    %v1279 = vpack.c.b16 %v1271, %v1270
    %1288 = vmatprep.subr.bf16.mxu0 0
    %1289 = vmatpush1.bf16.msra.mxu0 %v1279
    %1290 = vmatprep.subr.bf16.mxu0 0
    %1291 = vmatpush1.bf16.msra.mxu0 %v1278
    %1292 = vmatprep.subr.bf16.mxu0 0
    %1293 = vmatpush1.bf16.msra.mxu0 %v1277
    %1294 = vmatprep.subr.bf16.mxu0 0
    %1295 = vmatpush1.bf16.msra.mxu0 %v1276
    %1296 = vmatprep.subr.bf16.mxu0 0
    %1297 = vmatpush1.bf16.msra.mxu0 %v1275
    %1298 = vmatprep.subr.bf16.mxu0 0
    %1299 = vmatpush1.bf16.msra.mxu0 %v1274
    %1300 = vmatprep.subr.bf16.mxu0 0
    %1301 = vmatpush1.bf16.msra.mxu0 %v1273
    %1302 = vmatprep.subr.bf16.mxu0 0
    %1303 = vmatpush1.bf16.msra.mxu0 %v1272
    %1304 = vmatprep.subr.bf16.mxu0 0
    %1305 = vmatpush2.bf16.msra.mxu0 0
    %1306 = vmatprep.subr.bf16.mxu0 0
    %1307 = vmatpush2.bf16.msra.mxu0 0
    %1308 = vmatprep.subr.bf16.mxu0 0
    %1309 = vmatpush2.bf16.msra.mxu0 0
    %1310 = vmatprep.subr.bf16.mxu0 0
    %1311 = vmatpush2.bf16.msra.mxu0 0
    %1312 = vmatprep.subr.bf16.mxu0 0
    %1313 = vmatpush2.bf16.msra.mxu0 0
    %1314 = vmatprep.subr.bf16.mxu0 0
    %1315 = vmatpush2.bf16.msra.mxu0 0
    %1316 = vmatprep.subr.bf16.mxu0 0
    %1317 = vmatpush2.bf16.msra.mxu0 0
    %1318 = vmatprep.subr.bf16.mxu0 0
    %1319 = vmatpush2.bf16.msra.mxu0 0
    %1320 = vmatprep.mubr.bf16.mxu0 0
    %1321 = vmatmul.mubr.bf16.gmra.mxu0 %v1234
    %v1322 = vpop.f32.mrf.mxu0
    %v1323 = vadd.f32 %v1239, %v1322
    %v1324 = vpop.f32.mrf.mxu0
    %v1325 = vpop.f32.mrf.mxu0
    %v1326 = vadd.f32 %v1239, %v1325
    %v1327 = vpop.f32.mrf.mxu0
    %1328 = vdwg.mxu0
    %v1329 = vmul.f32 %v1323, 0.5
    %v1330 = vmul.f32 %v1326, 0.5
    %v1331 = vtanh.pop %v1329
    %v1332 = vtanh.pop %v1330
    %v1333 = vmul.f32 %v1331, 0.5
    %v1334 = vmul.f32 %v1332, 0.5
    %v1335 = vadd.f32 %v1333, 0.5
    %v1336 = vadd.f32 %v1334, 0.5
    %v1337 = vpack.c.bf16 %v1336, %v1335
    %1338 = vmatprep.subr.bf16.mxu0 0
    %1339 = vmatpush1.bf16.msra.mxu0 0
    %1340 = vmatprep.subr.bf16.mxu0 0
    %1341 = vmatpush1.bf16.msra.mxu0 0
    %1342 = vmatprep.subr.bf16.mxu0 0
    %1343 = vmatpush1.bf16.msra.mxu0 0
    %1344 = vmatprep.subr.bf16.mxu0 0
    %1345 = vmatpush1.bf16.msra.mxu0 0
    %1346 = vmatprep.subr.bf16.mxu0 0
    %1347 = vmatpush1.bf16.msra.mxu0 0
    %1348 = vmatprep.subr.bf16.mxu0 0
    %1349 = vmatpush1.bf16.msra.mxu0 0
    %1350 = vmatprep.subr.bf16.mxu0 0
    %1351 = vmatpush1.bf16.msra.mxu0 0
    %1352 = vmatprep.subr.bf16.mxu0 0
    %1353 = vmatpush1.bf16.msra.mxu0 %v1337
    %1354 = vmatprep.subr.bf16.mxu0 0
    %1355 = vmatpush2.bf16.msra.mxu0 0
    %1356 = vmatprep.subr.bf16.mxu0 0
    %1357 = vmatpush2.bf16.msra.mxu0 0
    %1358 = vmatprep.subr.bf16.mxu0 0
    %1359 = vmatpush2.bf16.msra.mxu0 0
    %1360 = vmatprep.subr.bf16.mxu0 0
    %1361 = vmatpush2.bf16.msra.mxu0 0
    %1362 = vmatprep.subr.bf16.mxu0 0
    %1363 = vmatpush2.bf16.msra.mxu0 0
    %1364 = vmatprep.subr.bf16.mxu0 0
    %1365 = vmatpush2.bf16.msra.mxu0 0
    %1366 = vmatprep.subr.bf16.mxu0 0
    %1367 = vmatpush2.bf16.msra.mxu0 0
    %1368 = vmatprep.subr.bf16.mxu0 0
    %1369 = vmatpush2.bf16.msra.mxu0 0
    %1370 = vmatprep.mubr.bf16.mxu0 0
    %1371 = vmatmul.mubr.bf16.gmra.mxu0 %v477
    %v1372 = vpop.f32.mrf.mxu0
    %v1373 = vadd.f32 0.0, %v1372
    %v1374 = vpop.f32.mrf.mxu0
    %v1375 = vpop.f32.mrf.mxu0
    %v1376 = vadd.f32 0.0, %v1375
    %v1377 = vpop.f32.mrf.mxu0
    %1378 = vmatprep.mubr.bf16.mxu0 0
    %1379 = vmatmul.mubr.bf16.gmra.mxu0 %v480
    %v1380 = vpop.f32.mrf.mxu0
    %v1381 = vadd.f32 0.0, %v1380
    %v1382 = vpop.f32.mrf.mxu0
    %v1383 = vpop.f32.mrf.mxu0
    %v1384 = vadd.f32 0.0, %v1383
    %v1385 = vpop.f32.mrf.mxu0
    %1386 = vmatprep.mubr.bf16.mxu0 0
    %1387 = vmatmul.mubr.bf16.gmra.mxu0 %v483
    %v1388 = vpop.f32.mrf.mxu0
    %v1389 = vadd.f32 0.0, %v1388
    %v1390 = vpop.f32.mrf.mxu0
    %v1391 = vpop.f32.mrf.mxu0
    %v1392 = vadd.f32 0.0, %v1391
    %v1393 = vpop.f32.mrf.mxu0
    %1394 = vmatprep.mubr.bf16.mxu0 0
    %1395 = vmatmul.mubr.bf16.gmra.mxu0 %v486
    %v1396 = vpop.f32.mrf.mxu0
    %v1397 = vadd.f32 0.0, %v1396
    %v1398 = vpop.f32.mrf.mxu0
    %v1399 = vpop.f32.mrf.mxu0
    %v1400 = vadd.f32 0.0, %v1399
    %v1401 = vpop.f32.mrf.mxu0
    %1402 = vmatprep.mubr.bf16.mxu0 0
    %1403 = vmatmul.mubr.bf16.gmra.mxu0 %v489
    %v1404 = vpop.f32.mrf.mxu0
    %v1405 = vadd.f32 0.0, %v1404
    %v1406 = vpop.f32.mrf.mxu0
    %v1407 = vpop.f32.mrf.mxu0
    %v1408 = vadd.f32 0.0, %v1407
    %v1409 = vpop.f32.mrf.mxu0
    %1410 = vmatprep.mubr.bf16.mxu0 0
    %1411 = vmatmul.mubr.bf16.gmra.mxu0 %v492
    %v1412 = vpop.f32.mrf.mxu0
    %v1413 = vadd.f32 0.0, %v1412
    %v1414 = vpop.f32.mrf.mxu0
    %v1415 = vpop.f32.mrf.mxu0
    %v1416 = vadd.f32 0.0, %v1415
    %v1417 = vpop.f32.mrf.mxu0
    %1418 = vmatprep.mubr.bf16.mxu0 0
    %1419 = vmatmul.mubr.bf16.gmra.mxu0 %v495
    %v1420 = vpop.f32.mrf.mxu0
    %v1421 = vadd.f32 0.0, %v1420
    %v1422 = vpop.f32.mrf.mxu0
    %v1423 = vpop.f32.mrf.mxu0
    %v1424 = vadd.f32 0.0, %v1423
    %v1425 = vpop.f32.mrf.mxu0
    %1426 = vmatprep.mubr.bf16.mxu0 0
    %1427 = vmatmul.mubr.bf16.gmra.mxu0 %v498
    %v1428 = vpop.f32.mrf.mxu0
    %v1429 = vadd.f32 0.0, %v1428
    %v1430 = vpop.f32.mrf.mxu0
    %v1431 = vpop.f32.mrf.mxu0
    %v1432 = vadd.f32 0.0, %v1431
    %v1433 = vpop.f32.mrf.mxu0
    %1434 = vdwg.mxu0
    %v1435 = vpack.c.bf16 %v1168, %v1167
    %v1436 = vpack.c.bf16 %v1170, %v1169
    %v1437 = vpack.c.bf16 %v1172, %v1171
    %v1438 = vpack.c.bf16 %v1174, %v1173
    %v1439 = vpack.c.bf16 %v1176, %v1175
    %v1440 = vpack.c.bf16 %v1178, %v1177
    %v1441 = vpack.c.bf16 %v1180, %v1179
    %v1442 = vpack.c.bf16 %v1182, %v1181
    %v1443 = vpack.c.bf16 %v1376, %v1373
    %v1444 = vpack.c.bf16 %v1384, %v1381
    %v1445 = vpack.c.bf16 %v1392, %v1389
    %v1446 = vpack.c.bf16 %v1400, %v1397
    %v1447 = vpack.c.bf16 %v1408, %v1405
    %v1448 = vpack.c.bf16 %v1416, %v1413
    %v1449 = vpack.c.bf16 %v1424, %v1421
    %v1450 = vpack.c.bf16 %v1432, %v1429
    %v1467 = vunpack.c.l.b16 %v1218
    %v1468 = vunpack.c.l.b16 %v1219
    %v1469 = vunpack.c.l.b16 %v1220
    %v1470 = vunpack.c.l.b16 %v1221
    %v1471 = vunpack.c.l.b16 %v1222
    %v1472 = vunpack.c.l.b16 %v1223
    %v1473 = vunpack.c.l.b16 %v1224
    %v1474 = vunpack.c.l.b16 %v1225
    %v1475 = vunpack.c.l.b16 %v1226
    %v1476 = vunpack.c.l.b16 %v1227
    %v1477 = vunpack.c.l.b16 %v1228
    %v1478 = vunpack.c.l.b16 %v1229
    %v1479 = vunpack.c.l.b16 %v1230
    %v1480 = vunpack.c.l.b16 %v1231
    %v1481 = vunpack.c.l.b16 %v1232
    %v1482 = vunpack.c.l.b16 %v1233
    %v1483 = vpack.c.b16 %v1468, %v1467
    %v1484 = vpack.c.b16 %v1470, %v1469
    %v1485 = vpack.c.b16 %v1472, %v1471
    %v1486 = vpack.c.b16 %v1474, %v1473
    %v1487 = vpack.c.b16 %v1476, %v1475
    %v1488 = vpack.c.b16 %v1478, %v1477
    %v1489 = vpack.c.b16 %v1480, %v1479
    %v1490 = vpack.c.b16 %v1482, %v1481
    %1499 = vmatprep.subr.bf16.mxu0 0
    %1500 = vmatpush1.bf16.msra.mxu0 %v1490
    %1501 = vmatprep.subr.bf16.mxu0 0
    %1502 = vmatpush1.bf16.msra.mxu0 %v1489
    %1503 = vmatprep.subr.bf16.mxu0 0
    %1504 = vmatpush1.bf16.msra.mxu0 %v1488
    %1505 = vmatprep.subr.bf16.mxu0 0
    %1506 = vmatpush1.bf16.msra.mxu0 %v1487
    %1507 = vmatprep.subr.bf16.mxu0 0
    %1508 = vmatpush1.bf16.msra.mxu0 %v1486
    %1509 = vmatprep.subr.bf16.mxu0 0
    %1510 = vmatpush1.bf16.msra.mxu0 %v1485
    %1511 = vmatprep.subr.bf16.mxu0 0
    %1512 = vmatpush1.bf16.msra.mxu0 %v1484
    %1513 = vmatprep.subr.bf16.mxu0 0
    %1514 = vmatpush1.bf16.msra.mxu0 %v1483
    %1515 = vmatprep.subr.bf16.mxu0 0
    %1516 = vmatpush2.bf16.msra.mxu0 0
    %1517 = vmatprep.subr.bf16.mxu0 0
    %1518 = vmatpush2.bf16.msra.mxu0 0
    %1519 = vmatprep.subr.bf16.mxu0 0
    %1520 = vmatpush2.bf16.msra.mxu0 0
    %1521 = vmatprep.subr.bf16.mxu0 0
    %1522 = vmatpush2.bf16.msra.mxu0 0
    %1523 = vmatprep.subr.bf16.mxu0 0
    %1524 = vmatpush2.bf16.msra.mxu0 0
    %1525 = vmatprep.subr.bf16.mxu0 0
    %1526 = vmatpush2.bf16.msra.mxu0 0
    %1527 = vmatprep.subr.bf16.mxu0 0
    %1528 = vmatpush2.bf16.msra.mxu0 0
    %1529 = vmatprep.subr.bf16.mxu0 0
    %1530 = vmatpush2.bf16.msra.mxu0 0
    %1531 = vmatprep.mubr.bf16.mxu0 0
    %1532 = vmatmul.mubr.bf16.gmra.mxu0 %v1443
    %v1533 = vpop.f32.mrf.mxu0
    %v1534 = vadd.f32 0.0, %v1533
    %v1535 = vpop.f32.mrf.mxu0
    %v1536 = vpop.f32.mrf.mxu0
    %v1537 = vadd.f32 0.0, %v1536
    %v1538 = vpop.f32.mrf.mxu0
    %1539 = vmatprep.mubr.bf16.mxu0 0
    %1540 = vmatmul.mubr.bf16.gmra.mxu0 %v1444
    %v1541 = vpop.f32.mrf.mxu0
    %v1542 = vadd.f32 0.0, %v1541
    %v1543 = vpop.f32.mrf.mxu0
    %v1544 = vpop.f32.mrf.mxu0
    %v1545 = vadd.f32 0.0, %v1544
    %v1546 = vpop.f32.mrf.mxu0
    %1547 = vmatprep.mubr.bf16.mxu0 0
    %1548 = vmatmul.mubr.bf16.gmra.mxu0 %v1445
    %v1549 = vpop.f32.mrf.mxu0
    %v1550 = vadd.f32 0.0, %v1549
    %v1551 = vpop.f32.mrf.mxu0
    %v1552 = vpop.f32.mrf.mxu0
    %v1553 = vadd.f32 0.0, %v1552
    %v1554 = vpop.f32.mrf.mxu0
    %1555 = vmatprep.mubr.bf16.mxu0 0
    %1556 = vmatmul.mubr.bf16.gmra.mxu0 %v1446
    %v1557 = vpop.f32.mrf.mxu0
    %v1558 = vadd.f32 0.0, %v1557
    %v1559 = vpop.f32.mrf.mxu0
    %v1560 = vpop.f32.mrf.mxu0
    %v1561 = vadd.f32 0.0, %v1560
    %v1562 = vpop.f32.mrf.mxu0
    %1563 = vmatprep.mubr.bf16.mxu0 0
    %1564 = vmatmul.mubr.bf16.gmra.mxu0 %v1447
    %v1565 = vpop.f32.mrf.mxu0
    %v1566 = vadd.f32 0.0, %v1565
    %v1567 = vpop.f32.mrf.mxu0
    %v1568 = vpop.f32.mrf.mxu0
    %v1569 = vadd.f32 0.0, %v1568
    %v1570 = vpop.f32.mrf.mxu0
    %1571 = vmatprep.mubr.bf16.mxu0 0
    %1572 = vmatmul.mubr.bf16.gmra.mxu0 %v1448
    %v1573 = vpop.f32.mrf.mxu0
    %v1574 = vadd.f32 0.0, %v1573
    %v1575 = vpop.f32.mrf.mxu0
    %v1576 = vpop.f32.mrf.mxu0
    %v1577 = vadd.f32 0.0, %v1576
    %v1578 = vpop.f32.mrf.mxu0
    %1579 = vmatprep.mubr.bf16.mxu0 0
    %1580 = vmatmul.mubr.bf16.gmra.mxu0 %v1449
    %v1581 = vpop.f32.mrf.mxu0
    %v1582 = vadd.f32 0.0, %v1581
    %v1583 = vpop.f32.mrf.mxu0
    %v1584 = vpop.f32.mrf.mxu0
    %v1585 = vadd.f32 0.0, %v1584
    %v1586 = vpop.f32.mrf.mxu0
    %1587 = vmatprep.mubr.bf16.mxu0 0
    %1588 = vmatmul.mubr.bf16.gmra.mxu0 %v1450
    %v1589 = vpop.f32.mrf.mxu0
    %v1590 = vadd.f32 0.0, %v1589
    %v1591 = vpop.f32.mrf.mxu0
    %v1592 = vpop.f32.mrf.mxu0
    %v1593 = vadd.f32 0.0, %v1592
    %v1594 = vpop.f32.mrf.mxu0
    %1595 = vdwg.mxu0
    %v1612 = vunpack.c.l.b16 %v1201
    %v1613 = vunpack.c.l.b16 %v1202
    %v1614 = vunpack.c.l.b16 %v1203
    %v1615 = vunpack.c.l.b16 %v1204
    %v1616 = vunpack.c.l.b16 %v1205
    %v1617 = vunpack.c.l.b16 %v1206
    %v1618 = vunpack.c.l.b16 %v1207
    %v1619 = vunpack.c.l.b16 %v1208
    %v1620 = vunpack.c.l.b16 %v1209
    %v1621 = vunpack.c.l.b16 %v1210
    %v1622 = vunpack.c.l.b16 %v1211
    %v1623 = vunpack.c.l.b16 %v1212
    %v1624 = vunpack.c.l.b16 %v1213
    %v1625 = vunpack.c.l.b16 %v1214
    %v1626 = vunpack.c.l.b16 %v1215
    %v1627 = vunpack.c.l.b16 %v1216
    %v1628 = vpack.c.b16 %v1613, %v1612
    %v1629 = vpack.c.b16 %v1615, %v1614
    %v1630 = vpack.c.b16 %v1617, %v1616
    %v1631 = vpack.c.b16 %v1619, %v1618
    %v1632 = vpack.c.b16 %v1621, %v1620
    %v1633 = vpack.c.b16 %v1623, %v1622
    %v1634 = vpack.c.b16 %v1625, %v1624
    %v1635 = vpack.c.b16 %v1627, %v1626
    %1644 = vmatprep.subr.bf16.mxu0 0
    %1645 = vmatpush1.bf16.msra.mxu0 %v1635
    %1646 = vmatprep.subr.bf16.mxu0 0
    %1647 = vmatpush1.bf16.msra.mxu0 %v1634
    %1648 = vmatprep.subr.bf16.mxu0 0
    %1649 = vmatpush1.bf16.msra.mxu0 %v1633
    %1650 = vmatprep.subr.bf16.mxu0 0
    %1651 = vmatpush1.bf16.msra.mxu0 %v1632
    %1652 = vmatprep.subr.bf16.mxu0 0
    %1653 = vmatpush1.bf16.msra.mxu0 %v1631
    %1654 = vmatprep.subr.bf16.mxu0 0
    %1655 = vmatpush1.bf16.msra.mxu0 %v1630
    %1656 = vmatprep.subr.bf16.mxu0 0
    %1657 = vmatpush1.bf16.msra.mxu0 %v1629
    %1658 = vmatprep.subr.bf16.mxu0 0
    %1659 = vmatpush1.bf16.msra.mxu0 %v1628
    %1660 = vmatprep.subr.bf16.mxu0 0
    %1661 = vmatpush2.bf16.msra.mxu0 0
    %1662 = vmatprep.subr.bf16.mxu0 0
    %1663 = vmatpush2.bf16.msra.mxu0 0
    %1664 = vmatprep.subr.bf16.mxu0 0
    %1665 = vmatpush2.bf16.msra.mxu0 0
    %1666 = vmatprep.subr.bf16.mxu0 0
    %1667 = vmatpush2.bf16.msra.mxu0 0
    %1668 = vmatprep.subr.bf16.mxu0 0
    %1669 = vmatpush2.bf16.msra.mxu0 0
    %1670 = vmatprep.subr.bf16.mxu0 0
    %1671 = vmatpush2.bf16.msra.mxu0 0
    %1672 = vmatprep.subr.bf16.mxu0 0
    %1673 = vmatpush2.bf16.msra.mxu0 0
    %1674 = vmatprep.subr.bf16.mxu0 0
    %1675 = vmatpush2.bf16.msra.mxu0 0
    %1676 = vmatprep.mubr.bf16.mxu0 0
    %1677 = vmatmul.mubr.bf16.gmra.mxu0 %v1435
    %v1678 = vpop.f32.mrf.mxu0
    %v1679 = vadd.f32 %v1534, %v1678
    %v1680 = vpop.f32.mrf.mxu0
    %v1681 = vpop.f32.mrf.mxu0
    %v1682 = vadd.f32 %v1537, %v1681
    %v1683 = vpop.f32.mrf.mxu0
    %1684 = vmatprep.mubr.bf16.mxu0 0
    %1685 = vmatmul.mubr.bf16.gmra.mxu0 %v1436
    %v1686 = vpop.f32.mrf.mxu0
    %v1687 = vadd.f32 %v1542, %v1686
    %v1688 = vpop.f32.mrf.mxu0
    %v1689 = vpop.f32.mrf.mxu0
    %v1690 = vadd.f32 %v1545, %v1689
    %v1691 = vpop.f32.mrf.mxu0
    %1692 = vmatprep.mubr.bf16.mxu0 0
    %1693 = vmatmul.mubr.bf16.gmra.mxu0 %v1437
    %v1694 = vpop.f32.mrf.mxu0
    %v1695 = vadd.f32 %v1550, %v1694
    %v1696 = vpop.f32.mrf.mxu0
    %v1697 = vpop.f32.mrf.mxu0
    %v1698 = vadd.f32 %v1553, %v1697
    %v1699 = vpop.f32.mrf.mxu0
    %1700 = vmatprep.mubr.bf16.mxu0 0
    %1701 = vmatmul.mubr.bf16.gmra.mxu0 %v1438
    %v1702 = vpop.f32.mrf.mxu0
    %v1703 = vadd.f32 %v1558, %v1702
    %v1704 = vpop.f32.mrf.mxu0
    %v1705 = vpop.f32.mrf.mxu0
    %v1706 = vadd.f32 %v1561, %v1705
    %v1707 = vpop.f32.mrf.mxu0
    %1708 = vmatprep.mubr.bf16.mxu0 0
    %1709 = vmatmul.mubr.bf16.gmra.mxu0 %v1439
    %v1710 = vpop.f32.mrf.mxu0
    %v1711 = vadd.f32 %v1566, %v1710
    %v1712 = vpop.f32.mrf.mxu0
    %v1713 = vpop.f32.mrf.mxu0
    %v1714 = vadd.f32 %v1569, %v1713
    %v1715 = vpop.f32.mrf.mxu0
    %1716 = vmatprep.mubr.bf16.mxu0 0
    %1717 = vmatmul.mubr.bf16.gmra.mxu0 %v1440
    %v1718 = vpop.f32.mrf.mxu0
    %v1719 = vadd.f32 %v1574, %v1718
    %v1720 = vpop.f32.mrf.mxu0
    %v1721 = vpop.f32.mrf.mxu0
    %v1722 = vadd.f32 %v1577, %v1721
    %v1723 = vpop.f32.mrf.mxu0
    %1724 = vmatprep.mubr.bf16.mxu0 0
    %1725 = vmatmul.mubr.bf16.gmra.mxu0 %v1441
    %v1726 = vpop.f32.mrf.mxu0
    %v1727 = vadd.f32 %v1582, %v1726
    %v1728 = vpop.f32.mrf.mxu0
    %v1729 = vpop.f32.mrf.mxu0
    %v1730 = vadd.f32 %v1585, %v1729
    %v1731 = vpop.f32.mrf.mxu0
    %1732 = vmatprep.mubr.bf16.mxu0 0
    %1733 = vmatmul.mubr.bf16.gmra.mxu0 %v1442
    %v1734 = vpop.f32.mrf.mxu0
    %v1735 = vadd.f32 %v1590, %v1734
    %v1736 = vpop.f32.mrf.mxu0
    %v1737 = vpop.f32.mrf.mxu0
    %v1738 = vadd.f32 %v1593, %v1737
    %v1739 = vpop.f32.mrf.mxu0
    %1740 = vdwg.mxu0
    %v1741 = vld [vmem:[%s5 + $0x9] sm:$0x1]
    %v1742 = vlaneseq
    %v1743 = vshrl.u32 %v1742, 7
    %v1744 = vsub.s32 0, %v1743
    %v1745 = vrot.slane %v1741, %v1744
    %v1746 = vadd.f32 %v1679, %v1745
    %v1747 = vadd.f32 %v1682, %v1745
    %v1748 = vadd.f32 %v1687, %v1745
    %v1749 = vadd.f32 %v1690, %v1745
    %v1750 = vadd.f32 %v1695, %v1745
    %v1751 = vadd.f32 %v1698, %v1745
    %v1752 = vadd.f32 %v1703, %v1745
    %v1753 = vadd.f32 %v1706, %v1745
    %v1754 = vadd.f32 %v1711, %v1745
    %v1755 = vadd.f32 %v1714, %v1745
    %v1756 = vadd.f32 %v1719, %v1745
    %v1757 = vadd.f32 %v1722, %v1745
    %v1758 = vadd.f32 %v1727, %v1745
    %v1759 = vadd.f32 %v1730, %v1745
    %v1760 = vadd.f32 %v1735, %v1745
    %v1761 = vadd.f32 %v1738, %v1745
    %v1762 = vmul.f32 %v1746, 0.5
    %v1763 = vmul.f32 %v1747, 0.5
    %v1764 = vmul.f32 %v1748, 0.5
    %v1765 = vmul.f32 %v1749, 0.5
    %v1766 = vmul.f32 %v1750, 0.5
    %v1767 = vmul.f32 %v1751, 0.5
    %v1768 = vmul.f32 %v1752, 0.5
    %v1769 = vmul.f32 %v1753, 0.5
    %v1770 = vmul.f32 %v1754, 0.5
    %v1771 = vmul.f32 %v1755, 0.5
    %v1772 = vmul.f32 %v1756, 0.5
    %v1773 = vmul.f32 %v1757, 0.5
    %v1774 = vmul.f32 %v1758, 0.5
    %v1775 = vmul.f32 %v1759, 0.5
    %v1776 = vmul.f32 %v1760, 0.5
    %v1777 = vmul.f32 %v1761, 0.5
    %v1778 = vtanh.pop %v1762
    %v1779 = vtanh.pop %v1763
    %v1780 = vtanh.pop %v1764
    %v1781 = vtanh.pop %v1765
    %v1782 = vtanh.pop %v1766
    %v1783 = vtanh.pop %v1767
    %v1784 = vtanh.pop %v1768
    %v1785 = vtanh.pop %v1769
    %v1786 = vtanh.pop %v1770
    %v1787 = vtanh.pop %v1771
    %v1788 = vtanh.pop %v1772
    %v1789 = vtanh.pop %v1773
    %v1790 = vtanh.pop %v1774
    %v1791 = vtanh.pop %v1775
    %v1792 = vtanh.pop %v1776
    %v1793 = vtanh.pop %v1777
    %v1794 = vmul.f32 %v1778, 0.5
    %v1795 = vmul.f32 %v1779, 0.5
    %v1796 = vmul.f32 %v1780, 0.5
    %v1797 = vmul.f32 %v1781, 0.5
    %v1798 = vmul.f32 %v1782, 0.5
    %v1799 = vmul.f32 %v1783, 0.5
    %v1800 = vmul.f32 %v1784, 0.5
    %v1801 = vmul.f32 %v1785, 0.5
    %v1802 = vmul.f32 %v1786, 0.5
    %v1803 = vmul.f32 %v1787, 0.5
    %v1804 = vmul.f32 %v1788, 0.5
    %v1805 = vmul.f32 %v1789, 0.5
    %v1806 = vmul.f32 %v1790, 0.5
    %v1807 = vmul.f32 %v1791, 0.5
    %v1808 = vmul.f32 %v1792, 0.5
    %v1809 = vmul.f32 %v1793, 0.5
    %v1810 = vadd.f32 %v1794, 0.5
    %v1811 = vadd.f32 %v1795, 0.5
    %v1812 = vadd.f32 %v1796, 0.5
    %v1813 = vadd.f32 %v1797, 0.5
    %v1814 = vadd.f32 %v1798, 0.5
    %v1815 = vadd.f32 %v1799, 0.5
    %v1816 = vadd.f32 %v1800, 0.5
    %v1817 = vadd.f32 %v1801, 0.5
    %v1818 = vadd.f32 %v1802, 0.5
    %v1819 = vadd.f32 %v1803, 0.5
    %v1820 = vadd.f32 %v1804, 0.5
    %v1821 = vadd.f32 %v1805, 0.5
    %v1822 = vadd.f32 %v1806, 0.5
    %v1823 = vadd.f32 %v1807, 0.5
    %v1824 = vadd.f32 %v1808, 0.5
    %v1825 = vadd.f32 %v1809, 0.5
    %v1826 = vpack.c.bf16 %v1811, %v1810
    %v1827 = vpack.c.bf16 %v1813, %v1812
    %v1828 = vpack.c.bf16 %v1815, %v1814
    %v1829 = vpack.c.bf16 %v1817, %v1816
    %v1830 = vpack.c.bf16 %v1819, %v1818
    %v1831 = vpack.c.bf16 %v1821, %v1820
    %v1832 = vpack.c.bf16 %v1823, %v1822
    %v1833 = vpack.c.bf16 %v1825, %v1824
    %1834 = vmatprep.subr.bf16.mxu0 0
    %1835 = vmatpush1.bf16.msra.mxu0 %v1833
    %1836 = vmatprep.subr.bf16.mxu0 0
    %1837 = vmatpush1.bf16.msra.mxu0 %v1832
    %1838 = vmatprep.subr.bf16.mxu0 0
    %1839 = vmatpush1.bf16.msra.mxu0 %v1831
    %1840 = vmatprep.subr.bf16.mxu0 0
    %1841 = vmatpush1.bf16.msra.mxu0 %v1830
    %1842 = vmatprep.subr.bf16.mxu0 0
    %1843 = vmatpush1.bf16.msra.mxu0 %v1829
    %1844 = vmatprep.subr.bf16.mxu0 0
    %1845 = vmatpush1.bf16.msra.mxu0 %v1828
    %1846 = vmatprep.subr.bf16.mxu0 0
    %1847 = vmatpush1.bf16.msra.mxu0 %v1827
    %1848 = vmatprep.subr.bf16.mxu0 0
    %1849 = vmatpush1.bf16.msra.mxu0 %v1826
    %1850 = vmatprep.subr.bf16.mxu0 0
    %1851 = vmatpush2.bf16.msra.mxu0 0
    %1852 = vmatprep.subr.bf16.mxu0 0
    %1853 = vmatpush2.bf16.msra.mxu0 0
    %1854 = vmatprep.subr.bf16.mxu0 0
    %1855 = vmatpush2.bf16.msra.mxu0 0
    %1856 = vmatprep.subr.bf16.mxu0 0
    %1857 = vmatpush2.bf16.msra.mxu0 0
    %1858 = vmatprep.subr.bf16.mxu0 0
    %1859 = vmatpush2.bf16.msra.mxu0 0
    %1860 = vmatprep.subr.bf16.mxu0 0
    %1861 = vmatpush2.bf16.msra.mxu0 0
    %1862 = vmatprep.subr.bf16.mxu0 0
    %1863 = vmatpush2.bf16.msra.mxu0 0
    %1864 = vmatprep.subr.bf16.mxu0 0
    %1865 = vmatpush2.bf16.msra.mxu0 0
    %1866 = vmatprep.mubr.bf16.mxu0 0
    %1867 = vmatmul.mubr.bf16.gmra.mxu0 %v458
    %v1868 = vpop.f32.mrf.mxu0
    %v1869 = vadd.f32 0.0, %v1868
    %v1870 = vpop.f32.mrf.mxu0
    %v1871 = vpop.f32.mrf.mxu0
    %v1872 = vadd.f32 0.0, %v1871
    %v1873 = vpop.f32.mrf.mxu0
    %1874 = vdwg.mxu0
    %v1875 = vld [vmem:[%s5 + $0xa] sm:$0x1]
    %v1876 = vlaneseq
    %v1877 = vshrl.u32 %v1876, 7
    %v1878 = vsub.s32 0, %v1877
    %v1879 = vrot.slane %v1875, %v1878
    %v1880 = vmul.f32 %v1059, %v1879
    %v1881 = vmul.f32 %v1060, %v1879
    %v1882 = vld [vmem:[%s5 + $0xb] sm:$0x1]
    %v1883 = vlaneseq
    %v1884 = vshrl.u32 %v1883, 7
    %v1885 = vsub.s32 0, %v1884
    %v1886 = vrot.slane %v1882, %v1885
    %v1887 = vadd.f32 %v1880, %v1886
    %v1888 = vadd.f32 %v1881, %v1886
    %v1889 = vadd.f32 %v1887, %v1869
    %v1890 = vadd.f32 %v1888, %v1872
    %v1891 = vmul.f32 %v1889, 0.5
    %v1892 = vmul.f32 %v1890, 0.5
    %v1893 = vtanh.pop %v1891
    %v1894 = vtanh.pop %v1892
    %v1895 = vmul.f32 %v1893, 0.5
    %v1896 = vmul.f32 %v1894, 0.5
    %v1897 = vadd.f32 %v1895, 0.5
    %v1898 = vadd.f32 %v1896, 0.5
    %v1899 = vld [vmem:[%s5 + $0xc] sm:$0x1]
    %v1900 = vlaneseq
    %v1901 = vshrl.u32 %v1900, 7
    %v1902 = vsub.s32 0, %v1901
    %v1903 = vrot.slane %v1899, %v1902
    %v1904 = vmul.f32 %v1167, %v1903
    %v1905 = vmul.f32 %v1168, %v1903
    %v1906 = vmul.f32 %v1169, %v1903
    %v1907 = vmul.f32 %v1170, %v1903
    %v1908 = vmul.f32 %v1171, %v1903
    %v1909 = vmul.f32 %v1172, %v1903
    %v1910 = vmul.f32 %v1173, %v1903
    %v1911 = vmul.f32 %v1174, %v1903
    %v1912 = vmul.f32 %v1175, %v1903
    %v1913 = vmul.f32 %v1176, %v1903
    %v1914 = vmul.f32 %v1177, %v1903
    %v1915 = vmul.f32 %v1178, %v1903
    %v1916 = vmul.f32 %v1179, %v1903
    %v1917 = vmul.f32 %v1180, %v1903
    %v1918 = vmul.f32 %v1181, %v1903
    %v1919 = vmul.f32 %v1182, %v1903
    %v1920 = vld [vmem:[%s5 + $0xd] sm:$0x1]
    %v1921 = vlaneseq
    %v1922 = vshrl.u32 %v1921, 7
    %v1923 = vsub.s32 0, %v1922
    %v1924 = vrot.slane %v1920, %v1923
    %v1925 = vadd.f32 %v1904, %v1924
    %v1926 = vadd.f32 %v1905, %v1924
    %v1927 = vadd.f32 %v1906, %v1924
    %v1928 = vadd.f32 %v1907, %v1924
    %v1929 = vadd.f32 %v1908, %v1924
    %v1930 = vadd.f32 %v1909, %v1924
    %v1931 = vadd.f32 %v1910, %v1924
    %v1932 = vadd.f32 %v1911, %v1924
    %v1933 = vadd.f32 %v1912, %v1924
    %v1934 = vadd.f32 %v1913, %v1924
    %v1935 = vadd.f32 %v1914, %v1924
    %v1936 = vadd.f32 %v1915, %v1924
    %v1937 = vadd.f32 %v1916, %v1924
    %v1938 = vadd.f32 %v1917, %v1924
    %v1939 = vadd.f32 %v1918, %v1924
    %v1940 = vadd.f32 %v1919, %v1924
    %v1941 = vadd.f32 %v1925, %v1373
    %v1942 = vadd.f32 %v1926, %v1376
    %v1943 = vadd.f32 %v1927, %v1381
    %v1944 = vadd.f32 %v1928, %v1384
    %v1945 = vadd.f32 %v1929, %v1389
    %v1946 = vadd.f32 %v1930, %v1392
    %v1947 = vadd.f32 %v1931, %v1397
    %v1948 = vadd.f32 %v1932, %v1400
    %v1949 = vadd.f32 %v1933, %v1405
    %v1950 = vadd.f32 %v1934, %v1408
    %v1951 = vadd.f32 %v1935, %v1413
    %v1952 = vadd.f32 %v1936, %v1416
    %v1953 = vadd.f32 %v1937, %v1421
    %v1954 = vadd.f32 %v1938, %v1424
    %v1955 = vadd.f32 %v1939, %v1429
    %v1956 = vadd.f32 %v1940, %v1432
    %v1957 = vmul.f32 %v1941, 0.5
    %v1958 = vmul.f32 %v1942, 0.5
    %v1959 = vmul.f32 %v1943, 0.5
    %v1960 = vmul.f32 %v1944, 0.5
    %v1961 = vmul.f32 %v1945, 0.5
    %v1962 = vmul.f32 %v1946, 0.5
    %v1963 = vmul.f32 %v1947, 0.5
    %v1964 = vmul.f32 %v1948, 0.5
    %v1965 = vmul.f32 %v1949, 0.5
    %v1966 = vmul.f32 %v1950, 0.5
    %v1967 = vmul.f32 %v1951, 0.5
    %v1968 = vmul.f32 %v1952, 0.5
    %v1969 = vmul.f32 %v1953, 0.5
    %v1970 = vmul.f32 %v1954, 0.5
    %v1971 = vmul.f32 %v1955, 0.5
    %v1972 = vmul.f32 %v1956, 0.5
    %v1973 = vtanh.pop %v1957
    %v1974 = vtanh.pop %v1958
    %v1975 = vtanh.pop %v1959
    %v1976 = vtanh.pop %v1960
    %v1977 = vtanh.pop %v1961
    %v1978 = vtanh.pop %v1962
    %v1979 = vtanh.pop %v1963
    %v1980 = vtanh.pop %v1964
    %v1981 = vtanh.pop %v1965
    %v1982 = vtanh.pop %v1966
    %v1983 = vtanh.pop %v1967
    %v1984 = vtanh.pop %v1968
    %v1985 = vtanh.pop %v1969
    %v1986 = vtanh.pop %v1970
    %v1987 = vtanh.pop %v1971
    %v1988 = vtanh.pop %v1972
    %v1989 = vmul.f32 %v1973, 0.5
    %v1990 = vmul.f32 %v1974, 0.5
    %v1991 = vmul.f32 %v1975, 0.5
    %v1992 = vmul.f32 %v1976, 0.5
    %v1993 = vmul.f32 %v1977, 0.5
    %v1994 = vmul.f32 %v1978, 0.5
    %v1995 = vmul.f32 %v1979, 0.5
    %v1996 = vmul.f32 %v1980, 0.5
    %v1997 = vmul.f32 %v1981, 0.5
    %v1998 = vmul.f32 %v1982, 0.5
    %v1999 = vmul.f32 %v1983, 0.5
    %v2000 = vmul.f32 %v1984, 0.5
    %v2001 = vmul.f32 %v1985, 0.5
    %v2002 = vmul.f32 %v1986, 0.5
    %v2003 = vmul.f32 %v1987, 0.5
    %v2004 = vmul.f32 %v1988, 0.5
    %v2005 = vadd.f32 %v1989, 0.5
    %v2006 = vadd.f32 %v1990, 0.5
    %v2007 = vadd.f32 %v1991, 0.5
    %v2008 = vadd.f32 %v1992, 0.5
    %v2009 = vadd.f32 %v1993, 0.5
    %v2010 = vadd.f32 %v1994, 0.5
    %v2011 = vadd.f32 %v1995, 0.5
    %v2012 = vadd.f32 %v1996, 0.5
    %v2013 = vadd.f32 %v1997, 0.5
    %v2014 = vadd.f32 %v1998, 0.5
    %v2015 = vadd.f32 %v1999, 0.5
    %v2016 = vadd.f32 %v2000, 0.5
    %v2017 = vadd.f32 %v2001, 0.5
    %v2018 = vadd.f32 %v2002, 0.5
    %v2019 = vadd.f32 %v2003, 0.5
    %v2020 = vadd.f32 %v2004, 0.5
    %2021 = vst [vmem:[#allocation5] sm:$0xff] %v1897
    %2022 = vst [vmem:[#allocation5 + $0x8] sm:$0xff] %v1898
    %2023 = vst [vmem:[#allocation6] sm:$0xff] %v2005
    %2024 = vst [vmem:[#allocation6 + $0x8] sm:$0xff] %v2006
    %2025 = vst [vmem:[#allocation6 + $0x10] sm:$0xff] %v2007
    %2026 = vst [vmem:[#allocation6 + $0x18] sm:$0xff] %v2008
    %2027 = vst [vmem:[#allocation6 + $0x20] sm:$0xff] %v2009
    %2028 = vst [vmem:[#allocation6 + $0x28] sm:$0xff] %v2010
    %2029 = vst [vmem:[#allocation6 + $0x30] sm:$0xff] %v2011
    %2030 = vst [vmem:[#allocation6 + $0x38] sm:$0xff] %v2012
    %2031 = vst [vmem:[#allocation6 + $0x40] sm:$0xff] %v2013
    %2032 = vst [vmem:[#allocation6 + $0x48] sm:$0xff] %v2014
    %2033 = vst [vmem:[#allocation6 + $0x50] sm:$0xff] %v2015
    %2034 = vst [vmem:[#allocation6 + $0x58] sm:$0xff] %v2016
    %2035 = vst [vmem:[#allocation6 + $0x60] sm:$0xff] %v2017
    %2036 = vst [vmem:[#allocation6 + $0x68] sm:$0xff] %v2018
    %2037 = vst [vmem:[#allocation6 + $0x70] sm:$0xff] %v2019
    %2038 = vst [vmem:[#allocation6 + $0x78] sm:$0xff] %v2020
    // Predicated region
    $region30: #{tpu_custom_call.1} parent=1 // pred_check
      _
    $region31: #{tpu_custom_call.1} parent=1 // pred_check_branch
      %2040 = sbr.rel (0) target = $region33
    $region32: #{tpu_custom_call.1} parent=1 // pred_region
      %s2042 = ssub.s32 256, 256
      %2043 = vsyncadd [#allocation4], %s2042
      %s2044 = sshll.u32 [#allocation5], 4
      %s2045 = int_to_ptr.vmem [resolvable:$true] %s2044
      %2050 = dma.vmem_to_hbm [thread:$0]  %s2045, 256, %s6, [#allocation4], 128, 128, 8
    $region33: #{tpu_custom_call.1} parent=1 // pred_fallthru
      _
    // Predicated region
    $region34: #{tpu_custom_call.1} parent=1 // pred_check
      _
    $region35: #{tpu_custom_call.1} parent=1 // pred_check_branch
      %2052 = sbr.rel (0) target = $region37
    $region36: #{tpu_custom_call.1} parent=1 // pred_region
      %s2054 = ssub.s32 2048, 2048
      %2055 = vsyncadd [#allocation7], %s2054
      %s2056 = sshll.u32 [#allocation6], 4
      %s2057 = int_to_ptr.vmem [resolvable:$true] %s2056
      %2062 = dma.vmem_to_hbm [thread:$0]  %s2057, 2048, %s7, [#allocation7], 128, 128, 8
    $region37: #{tpu_custom_call.1} parent=1 // pred_fallthru
      _
    // Predicated region
    $region38: #{tpu_custom_call.1} parent=1 // pred_check
      _
    $region39: #{tpu_custom_call.1} parent=1 // pred_check_branch
      %2064 = sbr.rel (0) target = $region41
    $region40: #{tpu_custom_call.1} parent=1 // pred_region
      %2065 = dma.done [#allocation4], 256
    $region41: #{tpu_custom_call.1} parent=1 // pred_fallthru
      _
    // Predicated region
    $region42: #{tpu_custom_call.1} parent=1 // pred_check
      _
    $region43: #{tpu_custom_call.1} parent=1 // pred_check_branch
      %2067 = sbr.rel (0) target = $region45
    $region44: #{tpu_custom_call.1} parent=1 // pred_region
      %2068 = dma.done [#allocation7], 2048
    $region45: #{tpu_custom_call.1} parent=1 // pred_fallthru
      _
    %2069 = vsyncpa [#allocation3], 1
    %2070 = vsyncpa [#allocation4], 1
    %2071 = vsyncpa [#allocation7], 1

</llo_original>
